<compile_context>
chip_gen: v5e
topology: v5e:2x2
jax: 0.10.0
libtpu: 0.0.40
codegen_flags: <defaults>
</compile_context>

<pallas_src>
import jax
import jax.numpy as jnp
from jax.experimental import pallas as pl
from jax.experimental.pallas import tpu as pltpu

# ----------------------------- config -----------------------------
IMG = 16
CHANNELS = 3
PATCH = 8
DIM = 32
DEPTH = 2
HEADS = 4
DIM_HEAD = 8
MLP_DIM = 64
NUM_CLASSES = 10

N_PATCHES = (IMG // PATCH) ** 2          # 4
N_TOKENS = N_PATCHES + 1                 # 5 (cls + patches)
PATCH_DIM = CHANNELS * PATCH * PATCH     # 192
INNER = HEADS * DIM_HEAD                 # 32
HEAD_PAD = 128                           # lane-dense classifier output

# Images folded into one grid step. Attention uses a block-diagonal mask over
# the folded (TB*N_TOKENS) token rows, so score matrices grow O(TB^2) -- keep
# TB moderate; 32 gives 160 token rows (MXU M dim full) at trivial extra cost.
MAX_TB = 32


# ------------------------- fused ViT kernel -------------------------
def _make_fused_vit_kernel(tb: int):
    tbn = tb * N_TOKENS
    scale = DIM_HEAD ** -0.5

    def kernel(tok_ref, pln1_ref, patch_w_ref, gvec_ref,
               tok_keep_ref, tok_fixed_ref, neg_ref, sel_ref,
               lvec_ref, qkv_w_ref, out_w_ref, ff1_w_ref, ff1_b_ref, ff2_w_ref,
               head_wb_ref, latents_ref, pred_ref):

        def ln(x, g, b, eps=1e-5):
            mean = jnp.mean(x, axis=-1, keepdims=True)
            var = jnp.mean(jnp.square(x - mean), axis=-1, keepdims=True)
            return (x - mean) * jax.lax.rsqrt(var + eps) * g + b

        def mm(a, b):
            return jnp.dot(a, b, preferred_element_type=jnp.float32)

        def mm_nt(a, b):  # a @ b.T without materializing a transpose
            return jax.lax.dot_general(a, b, (((1,), (1,)), ((), ())),
                                       preferred_element_type=jnp.float32)

        # ---- patch embedding (LN -> Linear -> LN) over all token rows ----
        # cls-placeholder rows (zeros) run through it too and are replaced below.
        x = tok_ref[...]                                       # (tbn, PATCH_DIM)
        x = ln(x, pln1_ref[0:1, :], pln1_ref[1:2, :])
        x = mm(x, patch_w_ref[...]) + gvec_ref[0:1, :]
        x = ln(x, gvec_ref[1:2, :], gvec_ref[2:3, :])

        # ---- cls token insertion + positional embedding (precomputed blend):
        # cls rows: 0*x + (cls + pos[0]); patch rows: x + pos[t]
        x = x * tok_keep_ref[...] + tok_fixed_ref[...]         # (tbn, DIM)

        neg = neg_ref[...]                                     # (tbn, tbn) 0 / -1e30 block-diag

        # ---- transformer layers (statically unrolled) ----
        for l in range(DEPTH):
            lv = lvec_ref[l]                                   # (6, DIM)
            # pre-norm multi-head self-attention (QKV has no bias, as in vit-pytorch)
            h = ln(x, lv[0:1, :], lv[1:2, :])
            qkv = mm(h, qkv_w_ref[l])                          # (tbn, 3*INNER)
            heads_out = []
            for hd in range(HEADS):
                q = qkv[:, hd * DIM_HEAD:(hd + 1) * DIM_HEAD]
                k = qkv[:, INNER + hd * DIM_HEAD:INNER + (hd + 1) * DIM_HEAD]
                v = qkv[:, 2 * INNER + hd * DIM_HEAD:2 * INNER + (hd + 1) * DIM_HEAD]
                s = mm_nt(q, k) * scale + neg                  # (tbn, tbn)
                s = s - jnp.max(s, axis=-1, keepdims=True)
                p = jnp.exp(s)
                p = p / jnp.sum(p, axis=-1, keepdims=True)     # exact softmax (parity)
                heads_out.append(mm(p, v))                     # (tbn, DIM_HEAD)
            o = jnp.concatenate(heads_out, axis=-1)            # (tbn, INNER), in vregs
            x = x + mm(o, out_w_ref[l]) + lv[2:3, :]

            # pre-norm feed-forward with GELU
            h = ln(x, lv[3:4, :], lv[4:5, :])
            h = mm(h, ff1_w_ref[l]) + ff1_b_ref[l:l + 1, :]
            # TODO(synk): PyTorch nn.GELU defaults to the exact erf form; erf has
            # no guaranteed Mosaic lowering, so the tanh approximation is used.
            h = jax.nn.gelu(h, approximate=True)
            x = x + mm(h, ff2_w_ref[l]) + lv[5:6, :]

        # ---- final LN: this is the `vit.transformer` output the hook captures ----
        x = ln(x, gvec_ref[3:4, :], gvec_ref[4:5, :])
        latents_ref[...] = x.astype(latents_ref.dtype)

        # ---- cls pooling (selection matmul, no strided gather) + classifier ----
        pooled = mm(sel_ref[...], x)                           # (tb, DIM)
        pred = mm(pooled, head_wb_ref[0:DIM, :]) + head_wb_ref[DIM:DIM + 1, :]
        pred_ref[...] = pred.astype(pred_ref.dtype)            # (tb, 128) dense store

    return kernel


# -------------------------- ViT forward ---------------------------
def vit_forward(params, img):
    """Returns (pred, transformer_output). transformer_output is exactly what
    the Extractor's forward hook on `vit.transformer` would capture."""
    B, C, H, W = img.shape
    p = PATCH
    # rearrange 'b c (h p1) (w p2) -> b (h w) (p1 p2 c)'  (glue, fused under jit)
    patches = img.reshape(B, C, H // p, p, W // p, p)
    patches = patches.transpose(0, 2, 4, 3, 5, 1).reshape(B, N_PATCHES, PATCH_DIM)

    tb = B if B <= MAX_TB else MAX_TB
    steps = (B + tb - 1) // tb
    b_pad = steps * tb
    if b_pad != B:
        patches = jnp.pad(patches, ((0, b_pad - B), (0, 0), (0, 0)))

    # Token-major 2D input: row 0 of each image is a zero placeholder for cls,
    # so the kernel never has to reshape / scatter token rows.
    tokens_in = jnp.concatenate(
        [jnp.zeros((b_pad, 1, PATCH_DIM), jnp.float32), patches], axis=1,
    ).reshape(b_pad * N_TOKENS, PATCH_DIM)

    tbn = tb * N_TOKENS

    # ---- packed / precomputed weights (tiny, fused under jit) ----
    pln1 = jnp.concatenate([params["patch_ln1_g"], params["patch_ln1_b"]], axis=0)  # (2, PATCH_DIM)
    gvec = jnp.concatenate(
        [params["patch_b"], params["patch_ln2_g"], params["patch_ln2_b"],
         params["final_ln_g"], params["final_ln_b"]], axis=0)                       # (5, DIM)
    lvec = jnp.stack(
        [params["attn_ln_g"], params["attn_ln_b"], params["out_b"],
         params["ff_ln_g"], params["ff_ln_b"], params["ff2_b"]], axis=1)            # (DEPTH, 6, DIM)

    row = jnp.arange(tbn)
    is_cls = (row % N_TOKENS) == 0
    pos_tiled = jnp.tile(params["pos"], (tb, 1))                                    # (tbn, DIM)
    tok_keep = jnp.broadcast_to(
        jnp.where(is_cls, 0.0, 1.0).astype(jnp.float32)[:, None], (tbn, DIM))
    tok_fixed = pos_tiled + jnp.where(is_cls[:, None], params["cls"], 0.0)          # (tbn, DIM)
    img_id = row // N_TOKENS
    neg_mask = jnp.where(img_id[:, None] == img_id[None, :],
                         0.0, -1e30).astype(jnp.float32)                            # (tbn, tbn)
    sel = (row[None, :] == (jnp.arange(tb) * N_TOKENS)[:, None]).astype(jnp.float32)  # (tb, tbn)

    head_w_pad = jnp.pad(params["head_w"], ((0, 0), (0, HEAD_PAD - NUM_CLASSES)))
    head_b_pad = jnp.pad(params["head_b"], ((0, 0), (0, HEAD_PAD - NUM_CLASSES)))
    head_wb = jnp.concatenate([head_w_pad, head_b_pad], axis=0)                     # (DIM+1, 128)

    weights = [pln1, params["patch_w"], gvec, tok_keep, tok_fixed, neg_mask, sel,
               lvec, params["qkv_w"], params["out_w"], params["ff1_w"],
               params["ff1_b"], params["ff2_w"], head_wb]

    def wspec(arr):
        if arr.ndim == 3:
            return pl.BlockSpec(arr.shape, lambda g: (0, 0, 0))
        return pl.BlockSpec(arr.shape, lambda g: (0, 0))

    latents2d, pred_pad = pl.pallas_call(
        _make_fused_vit_kernel(tb),
        out_shape=(
            jax.ShapeDtypeStruct((b_pad * N_TOKENS, DIM), jnp.float32),
            jax.ShapeDtypeStruct((b_pad, HEAD_PAD), jnp.float32),
        ),
        grid=(steps,),
        in_specs=[pl.BlockSpec((tbn, PATCH_DIM), lambda g: (g, 0))]
        + [wspec(w) for w in weights],
        out_specs=(
            pl.BlockSpec((tbn, DIM), lambda g: (g, 0)),
            pl.BlockSpec((tb, HEAD_PAD), lambda g: (g, 0)),
        ),
        compiler_params=pltpu.CompilerParams(dimension_semantics=("parallel",)),
    )(tokens_in, *weights)

    latents = latents2d.reshape(b_pad, N_TOKENS, DIM)[:B]
    pred = pred_pad[:B, :NUM_CLASSES]
    return pred, latents


# --------------------------- ViT params ---------------------------
def init_params(key):
    keys = iter(jax.random.split(key, 16))

    def nrm(shape, scale=0.02):
        return (scale * jax.random.normal(next(keys), shape)).astype(jnp.float32)

    return {
        "patch_ln1_g": jnp.ones((1, PATCH_DIM), jnp.float32),
        "patch_ln1_b": jnp.zeros((1, PATCH_DIM), jnp.float32),
        "patch_w": nrm((PATCH_DIM, DIM)),
        "patch_b": jnp.zeros((1, DIM), jnp.float32),
        "patch_ln2_g": jnp.ones((1, DIM), jnp.float32),
        "patch_ln2_b": jnp.zeros((1, DIM), jnp.float32),
        "cls": nrm((1, DIM)),
        "pos": nrm((N_TOKENS, DIM)),
        # per-layer weights stacked along a leading DEPTH axis
        "attn_ln_g": jnp.ones((DEPTH, DIM), jnp.float32),
        "attn_ln_b": jnp.zeros((DEPTH, DIM), jnp.float32),
        "qkv_w": nrm((DEPTH, DIM, 3 * INNER)),          # bias=False in vit-pytorch
        "out_w": nrm((DEPTH, INNER, DIM)),
        "out_b": jnp.zeros((DEPTH, DIM), jnp.float32),
        "ff_ln_g": jnp.ones((DEPTH, DIM), jnp.float32),
        "ff_ln_b": jnp.zeros((DEPTH, DIM), jnp.float32),
        "ff1_w": nrm((DEPTH, DIM, MLP_DIM)),
        "ff1_b": jnp.zeros((DEPTH, MLP_DIM), jnp.float32),
        "ff2_w": nrm((DEPTH, MLP_DIM, DIM)),
        "ff2_b": jnp.zeros((DEPTH, DIM), jnp.float32),
        "final_ln_g": jnp.ones((1, DIM), jnp.float32),
        "final_ln_b": jnp.zeros((1, DIM), jnp.float32),
        "head_w": nrm((DIM, NUM_CLASSES)),
        "head_b": jnp.zeros((1, NUM_CLASSES), jnp.float32),
    }


# --------------------------- Extractor ----------------------------
class Extractor:
    """JAX/Pallas analogue of vit_pytorch.extractor.Extractor.

    Runs the ViT and returns (pred, latents), where latents is the output of
    the `transformer` layer (captured via a forward hook in PyTorch)."""

    def __init__(self, params, return_embeddings_only=False, detach=True):
        self.params = params
        self.return_embeddings_only = return_embeddings_only
        self.latents = None
        # clone_and_detach: JAX arrays are immutable, so "clone" is a no-op;
        # "detach" maps to stop_gradient.
        self.detach_fn = (lambda t: jax.lax.stop_gradient(t)) if detach else (lambda t: t)
        # whole forward (patch rearrange + fused Pallas kernel + output slice)
        # compiled as one XLA program -> single host dispatch.
        self._forward = jax.jit(vit_forward)
        # TODO(synk): PyTorch `.to(device)` target-device move has no in-kernel
        # equivalent; results stay on the default JAX device.

    def clear(self):
        self.latents = None

    def __call__(self, img, return_embeddings_only=False):
        self.clear()
        pred, transformer_out = self._forward(self.params, img)
        self.latents = self.detach_fn(transformer_out)
        if return_embeddings_only or self.return_embeddings_only:
            return self.latents
        return pred, self.latents


# ------------------------------ main ------------------------------
if __name__ == "__main__":
    key = jax.random.PRNGKey(0)
    pkey, xkey = jax.random.split(key)
    params = init_params(pkey)
    img = jax.random.normal(xkey, (2, CHANNELS, IMG, IMG), dtype=jnp.float32)

    extractor = Extractor(params)
    pred, latents = extractor(img)
    jax.block_until_ready(pred)
    jax.block_until_ready(latents)

    assert pred.shape == (2, NUM_CLASSES), pred.shape
    assert latents.shape == (2, N_TOKENS, DIM), latents.shape
    assert jnp.all(jnp.isfinite(pred)) and jnp.all(jnp.isfinite(latents))
    print("KERNEL_OK")
</pallas_src>

<mosaic_0001>
module attributes {stable_mosaic.version = 11 : i64} {
  func.func @kernel(%arg0: i32, %arg1: memref<10x192xf32, #tpu.memory_space<vmem>>, %arg2: memref<2x192xf32, #tpu.memory_space<vmem>>, %arg3: memref<192x32xf32, #tpu.memory_space<vmem>>, %arg4: memref<5x32xf32, #tpu.memory_space<vmem>>, %arg5: memref<10x32xf32, #tpu.memory_space<vmem>>, %arg6: memref<10x32xf32, #tpu.memory_space<vmem>>, %arg7: memref<10x10xf32, #tpu.memory_space<vmem>>, %arg8: memref<2x10xf32, #tpu.memory_space<vmem>>, %arg9: memref<2x6x32xf32, #tpu.memory_space<vmem>>, %arg10: memref<2x32x96xf32, #tpu.memory_space<vmem>>, %arg11: memref<2x32x32xf32, #tpu.memory_space<vmem>>, %arg12: memref<2x32x64xf32, #tpu.memory_space<vmem>>, %arg13: memref<2x64xf32, #tpu.memory_space<vmem>>, %arg14: memref<2x64x32xf32, #tpu.memory_space<vmem>>, %arg15: memref<33x128xf32, #tpu.memory_space<vmem>>, %arg16: memref<10x32xf32, #tpu.memory_space<vmem>>, %arg17: memref<2x128xf32, #tpu.memory_space<vmem>>) attributes {dimension_semantics = [#tpu.dimension_semantics<parallel>], iteration_bounds = array<i64: 1>, scalar_prefetch = 0 : i64, scratch_operands = 0 : i64, tpu.core_type = #tpu.core_type<tc>, window_params = [{transform_indices = @transform_0, window_bounds = array<i64: 10, 192>}, {pipeline_mode = #tpu.pipeline_mode<synchronous>, transform_indices = @transform_1, window_bounds = array<i64: 2, 192>}, {pipeline_mode = #tpu.pipeline_mode<synchronous>, transform_indices = @transform_2, window_bounds = array<i64: 192, 32>}, {pipeline_mode = #tpu.pipeline_mode<synchronous>, transform_indices = @transform_3, window_bounds = array<i64: 5, 32>}, {pipeline_mode = #tpu.pipeline_mode<synchronous>, transform_indices = @transform_4, window_bounds = array<i64: 10, 32>}, {pipeline_mode = #tpu.pipeline_mode<synchronous>, transform_indices = @transform_5, window_bounds = array<i64: 10, 32>}, {pipeline_mode = #tpu.pipeline_mode<synchronous>, transform_indices = @transform_6, window_bounds = array<i64: 10, 10>}, {pipeline_mode = #tpu.pipeline_mode<synchronous>, transform_indices = @transform_7, window_bounds = array<i64: 2, 10>}, {pipeline_mode = #tpu.pipeline_mode<synchronous>, transform_indices = @transform_8, window_bounds = array<i64: 2, 6, 32>}, {pipeline_mode = #tpu.pipeline_mode<synchronous>, transform_indices = @transform_9, window_bounds = array<i64: 2, 32, 96>}, {pipeline_mode = #tpu.pipeline_mode<synchronous>, transform_indices = @transform_10, window_bounds = array<i64: 2, 32, 32>}, {pipeline_mode = #tpu.pipeline_mode<synchronous>, transform_indices = @transform_11, window_bounds = array<i64: 2, 32, 64>}, {pipeline_mode = #tpu.pipeline_mode<synchronous>, transform_indices = @transform_12, window_bounds = array<i64: 2, 64>}, {pipeline_mode = #tpu.pipeline_mode<synchronous>, transform_indices = @transform_13, window_bounds = array<i64: 2, 64, 32>}, {pipeline_mode = #tpu.pipeline_mode<synchronous>, transform_indices = @transform_14, window_bounds = array<i64: 33, 128>}, {transform_indices = @transform_15, window_bounds = array<i64: 10, 32>}, {transform_indices = @transform_16, window_bounds = array<i64: 2, 128>}]} {
    %c0 = arith.constant 0 : index
    %c0_0 = arith.constant 0 : index
    %0 = vector.load %arg1[%c0, %c0_0] : memref<10x192xf32, #tpu.memory_space<vmem>>, vector<10x192xf32>
    %c0_1 = arith.constant 0 : index
    %c0_2 = arith.constant 0 : index
    %1 = vector.load %arg2[%c0_1, %c0_2] : memref<2x192xf32, #tpu.memory_space<vmem>>, vector<1x192xf32>
    %c1 = arith.constant 1 : index
    %c0_3 = arith.constant 0 : index
    %2 = vector.load %arg2[%c1, %c0_3] : memref<2x192xf32, #tpu.memory_space<vmem>>, vector<1x192xf32>
    %cst = arith.constant dense<0.000000e+00> : vector<10xf32>
    %3 = vector.multi_reduction <add>, %0, %cst [1] : vector<10x192xf32> to vector<10xf32>
    %4 = vector.shape_cast %3 : vector<10xf32> to vector<10x1xf32>
    %cst_4 = arith.constant 1.920000e+02 : f32
    %5 = vector.broadcast %cst_4 : f32 to vector<10x1xf32>
    %6 = arith.divf %4, %5 : vector<10x1xf32>
    %7 = vector.broadcast %6 : vector<10x1xf32> to vector<10x192xf32>
    %8 = arith.subf %0, %7 : vector<10x192xf32>
    %9 = arith.mulf %8, %8 : vector<10x192xf32>
    %cst_5 = arith.constant dense<0.000000e+00> : vector<10xf32>
    %10 = vector.multi_reduction <add>, %9, %cst_5 [1] : vector<10x192xf32> to vector<10xf32>
    %11 = vector.shape_cast %10 : vector<10xf32> to vector<10x1xf32>
    %cst_6 = arith.constant 1.920000e+02 : f32
    %12 = vector.broadcast %cst_6 : f32 to vector<10x1xf32>
    %13 = arith.divf %11, %12 : vector<10x1xf32>
    %14 = vector.broadcast %6 : vector<10x1xf32> to vector<10x192xf32>
    %15 = arith.subf %0, %14 : vector<10x192xf32>
    %cst_7 = arith.constant 9.99999974E-6 : f32
    %16 = vector.broadcast %cst_7 : f32 to vector<10x1xf32>
    %17 = arith.addf %13, %16 : vector<10x1xf32>
    %18 = math.rsqrt %17 : vector<10x1xf32>
    %19 = vector.broadcast %18 : vector<10x1xf32> to vector<10x192xf32>
    %20 = arith.mulf %15, %19 : vector<10x192xf32>
    %21 = vector.broadcast %1 : vector<1x192xf32> to vector<10x192xf32>
    %22 = arith.mulf %20, %21 : vector<10x192xf32>
    %23 = vector.broadcast %2 : vector<1x192xf32> to vector<10x192xf32>
    %24 = arith.addf %22, %23 : vector<10x192xf32>
    %c0_8 = arith.constant 0 : index
    %c0_9 = arith.constant 0 : index
    %25 = vector.load %arg3[%c0_8, %c0_9] : memref<192x32xf32, #tpu.memory_space<vmem>>, vector<192x32xf32>
    %cst_10 = arith.constant dense<0.000000e+00> : vector<10x32xf32>
    %26 = tpu.matmul %24, %25, %cst_10 {dimension_numbers = #tpu.dot_dimension_numbers<[1], [0], [0], [1], [0, 0, 1, 1], [], []>} : vector<10x192xf32>, vector<192x32xf32>, vector<10x32xf32> -> vector<10x32xf32>
    %c0_11 = arith.constant 0 : index
    %c0_12 = arith.constant 0 : index
    %27 = vector.load %arg4[%c0_11, %c0_12] : memref<5x32xf32, #tpu.memory_space<vmem>>, vector<1x32xf32>
    %28 = vector.broadcast %27 : vector<1x32xf32> to vector<10x32xf32>
    %29 = arith.addf %26, %28 : vector<10x32xf32>
    %c1_13 = arith.constant 1 : index
    %c0_14 = arith.constant 0 : index
    %30 = vector.load %arg4[%c1_13, %c0_14] : memref<5x32xf32, #tpu.memory_space<vmem>>, vector<1x32xf32>
    %c2 = arith.constant 2 : index
    %c0_15 = arith.constant 0 : index
    %31 = vector.load %arg4[%c2, %c0_15] : memref<5x32xf32, #tpu.memory_space<vmem>>, vector<1x32xf32>
    %cst_16 = arith.constant dense<0.000000e+00> : vector<10xf32>
    %32 = vector.multi_reduction <add>, %29, %cst_16 [1] : vector<10x32xf32> to vector<10xf32>
    %33 = vector.shape_cast %32 : vector<10xf32> to vector<10x1xf32>
    %cst_17 = arith.constant 3.200000e+01 : f32
    %34 = vector.broadcast %cst_17 : f32 to vector<10x1xf32>
    %35 = arith.divf %33, %34 : vector<10x1xf32>
    %36 = vector.broadcast %35 : vector<10x1xf32> to vector<10x32xf32>
    %37 = arith.subf %29, %36 : vector<10x32xf32>
    %38 = arith.mulf %37, %37 : vector<10x32xf32>
    %cst_18 = arith.constant dense<0.000000e+00> : vector<10xf32>
    %39 = vector.multi_reduction <add>, %38, %cst_18 [1] : vector<10x32xf32> to vector<10xf32>
    %40 = vector.shape_cast %39 : vector<10xf32> to vector<10x1xf32>
    %cst_19 = arith.constant 3.200000e+01 : f32
    %41 = vector.broadcast %cst_19 : f32 to vector<10x1xf32>
    %42 = arith.divf %40, %41 : vector<10x1xf32>
    %43 = vector.broadcast %35 : vector<10x1xf32> to vector<10x32xf32>
    %44 = arith.subf %29, %43 : vector<10x32xf32>
    %cst_20 = arith.constant 9.99999974E-6 : f32
    %45 = vector.broadcast %cst_20 : f32 to vector<10x1xf32>
    %46 = arith.addf %42, %45 : vector<10x1xf32>
    %47 = math.rsqrt %46 : vector<10x1xf32>
    %48 = vector.broadcast %47 : vector<10x1xf32> to vector<10x32xf32>
    %49 = arith.mulf %44, %48 : vector<10x32xf32>
    %50 = vector.broadcast %30 : vector<1x32xf32> to vector<10x32xf32>
    %51 = arith.mulf %49, %50 : vector<10x32xf32>
    %52 = vector.broadcast %31 : vector<1x32xf32> to vector<10x32xf32>
    %53 = arith.addf %51, %52 : vector<10x32xf32>
    %c0_21 = arith.constant 0 : index
    %c0_22 = arith.constant 0 : index
    %54 = vector.load %arg5[%c0_21, %c0_22] : memref<10x32xf32, #tpu.memory_space<vmem>>, vector<10x32xf32>
    %55 = arith.mulf %53, %54 : vector<10x32xf32>
    %c0_23 = arith.constant 0 : index
    %c0_24 = arith.constant 0 : index
    %56 = vector.load %arg6[%c0_23, %c0_24] : memref<10x32xf32, #tpu.memory_space<vmem>>, vector<10x32xf32>
    %57 = arith.addf %55, %56 : vector<10x32xf32>
    %c0_25 = arith.constant 0 : index
    %c0_26 = arith.constant 0 : index
    %58 = vector.load %arg7[%c0_25, %c0_26] : memref<10x10xf32, #tpu.memory_space<vmem>>, vector<10x10xf32>
    %c0_27 = arith.constant 0 : index
    %c0_28 = arith.constant 0 : index
    %c0_29 = arith.constant 0 : index
    %59 = vector.load %arg9[%c0_27, %c0_28, %c0_29] : memref<2x6x32xf32, #tpu.memory_space<vmem>>, vector<1x6x32xf32>
    %60 = vector.shape_cast %59 : vector<1x6x32xf32> to vector<6x32xf32>
    %61 = vector.extract_strided_slice %60 {offsets = [0, 0], sizes = [1, 32], strides = [1, 1]} : vector<6x32xf32> to vector<1x32xf32>
    %62 = vector.extract_strided_slice %60 {offsets = [1, 0], sizes = [1, 32], strides = [1, 1]} : vector<6x32xf32> to vector<1x32xf32>
    %cst_30 = arith.constant dense<0.000000e+00> : vector<10xf32>
    %63 = vector.multi_reduction <add>, %57, %cst_30 [1] : vector<10x32xf32> to vector<10xf32>
    %64 = vector.shape_cast %63 : vector<10xf32> to vector<10x1xf32>
    %cst_31 = arith.constant 3.200000e+01 : f32
    %65 = vector.broadcast %cst_31 : f32 to vector<10x1xf32>
    %66 = arith.divf %64, %65 : vector<10x1xf32>
    %67 = vector.broadcast %66 : vector<10x1xf32> to vector<10x32xf32>
    %68 = arith.subf %57, %67 : vector<10x32xf32>
    %69 = arith.mulf %68, %68 : vector<10x32xf32>
    %cst_32 = arith.constant dense<0.000000e+00> : vector<10xf32>
    %70 = vector.multi_reduction <add>, %69, %cst_32 [1] : vector<10x32xf32> to vector<10xf32>
    %71 = vector.shape_cast %70 : vector<10xf32> to vector<10x1xf32>
    %cst_33 = arith.constant 3.200000e+01 : f32
    %72 = vector.broadcast %cst_33 : f32 to vector<10x1xf32>
    %73 = arith.divf %71, %72 : vector<10x1xf32>
    %74 = vector.broadcast %66 : vector<10x1xf32> to vector<10x32xf32>
    %75 = arith.subf %57, %74 : vector<10x32xf32>
    %cst_34 = arith.constant 9.99999974E-6 : f32
    %76 = vector.broadcast %cst_34 : f32 to vector<10x1xf32>
    %77 = arith.addf %73, %76 : vector<10x1xf32>
    %78 = math.rsqrt %77 : vector<10x1xf32>
    %79 = vector.broadcast %78 : vector<10x1xf32> to vector<10x32xf32>
    %80 = arith.mulf %75, %79 : vector<10x32xf32>
    %81 = vector.broadcast %61 : vector<1x32xf32> to vector<10x32xf32>
    %82 = arith.mulf %80, %81 : vector<10x32xf32>
    %83 = vector.broadcast %62 : vector<1x32xf32> to vector<10x32xf32>
    %84 = arith.addf %82, %83 : vector<10x32xf32>
    %c0_35 = arith.constant 0 : index
    %c0_36 = arith.constant 0 : index
    %c0_37 = arith.constant 0 : index
    %85 = vector.load %arg10[%c0_35, %c0_36, %c0_37] : memref<2x32x96xf32, #tpu.memory_space<vmem>>, vector<1x32x96xf32>
    %86 = vector.shape_cast %85 : vector<1x32x96xf32> to vector<32x96xf32>
    %cst_38 = arith.constant dense<0.000000e+00> : vector<10x96xf32>
    %87 = tpu.matmul %84, %86, %cst_38 {dimension_numbers = #tpu.dot_dimension_numbers<[1], [0], [0], [1], [0, 0, 1, 1], [], []>} : vector<10x32xf32>, vector<32x96xf32>, vector<10x96xf32> -> vector<10x96xf32>
    %88 = vector.extract_strided_slice %87 {offsets = [0, 0], sizes = [10, 8], strides = [1, 1]} : vector<10x96xf32> to vector<10x8xf32>
    %89 = vector.extract_strided_slice %87 {offsets = [0, 32], sizes = [10, 8], strides = [1, 1]} : vector<10x96xf32> to vector<10x8xf32>
    %90 = vector.extract_strided_slice %87 {offsets = [0, 64], sizes = [10, 8], strides = [1, 1]} : vector<10x96xf32> to vector<10x8xf32>
    %cst_39 = arith.constant dense<0.000000e+00> : vector<10x10xf32>
    %91 = tpu.matmul %88, %89, %cst_39 {dimension_numbers = #tpu.dot_dimension_numbers<[1], [1], [0], [0], [0, 0, 1, 0], [], []>} : vector<10x8xf32>, vector<10x8xf32>, vector<10x10xf32> -> vector<10x10xf32>
    %cst_40 = arith.constant 0.353553385 : f32
    %92 = vector.broadcast %cst_40 : f32 to vector<10x10xf32>
    %93 = arith.mulf %91, %92 : vector<10x10xf32>
    %94 = arith.addf %93, %58 : vector<10x10xf32>
    %cst_41 = arith.constant dense<0xFF800000> : vector<10xf32>
    %95 = vector.multi_reduction <maximumf>, %94, %cst_41 [1] : vector<10x10xf32> to vector<10xf32>
    %96 = vector.shape_cast %95 : vector<10xf32> to vector<10x1xf32>
    %97 = vector.broadcast %96 : vector<10x1xf32> to vector<10x10xf32>
    %98 = arith.subf %94, %97 : vector<10x10xf32>
    %99 = math.exp %98 : vector<10x10xf32>
    %cst_42 = arith.constant dense<0.000000e+00> : vector<10xf32>
    %100 = vector.multi_reduction <add>, %99, %cst_42 [1] : vector<10x10xf32> to vector<10xf32>
    %101 = vector.shape_cast %100 : vector<10xf32> to vector<10x1xf32>
    %102 = vector.broadcast %101 : vector<10x1xf32> to vector<10x10xf32>
    %103 = arith.divf %99, %102 : vector<10x10xf32>
    %cst_43 = arith.constant dense<0.000000e+00> : vector<10x8xf32>
    %104 = tpu.matmul %103, %90, %cst_43 {dimension_numbers = #tpu.dot_dimension_numbers<[1], [0], [0], [1], [0, 0, 1, 1], [], []>} : vector<10x10xf32>, vector<10x8xf32>, vector<10x8xf32> -> vector<10x8xf32>
    %105 = vector.extract_strided_slice %87 {offsets = [0, 8], sizes = [10, 8], strides = [1, 1]} : vector<10x96xf32> to vector<10x8xf32>
    %106 = vector.extract_strided_slice %87 {offsets = [0, 40], sizes = [10, 8], strides = [1, 1]} : vector<10x96xf32> to vector<10x8xf32>
    %107 = vector.extract_strided_slice %87 {offsets = [0, 72], sizes = [10, 8], strides = [1, 1]} : vector<10x96xf32> to vector<10x8xf32>
    %cst_44 = arith.constant dense<0.000000e+00> : vector<10x10xf32>
    %108 = tpu.matmul %105, %106, %cst_44 {dimension_numbers = #tpu.dot_dimension_numbers<[1], [1], [0], [0], [0, 0, 1, 0], [], []>} : vector<10x8xf32>, vector<10x8xf32>, vector<10x10xf32> -> vector<10x10xf32>
    %cst_45 = arith.constant 0.353553385 : f32
    %109 = vector.broadcast %cst_45 : f32 to vector<10x10xf32>
    %110 = arith.mulf %108, %109 : vector<10x10xf32>
    %111 = arith.addf %110, %58 : vector<10x10xf32>
    %cst_46 = arith.constant dense<0xFF800000> : vector<10xf32>
    %112 = vector.multi_reduction <maximumf>, %111, %cst_46 [1] : vector<10x10xf32> to vector<10xf32>
    %113 = vector.shape_cast %112 : vector<10xf32> to vector<10x1xf32>
    %114 = vector.broadcast %113 : vector<10x1xf32> to vector<10x10xf32>
    %115 = arith.subf %111, %114 : vector<10x10xf32>
    %116 = math.exp %115 : vector<10x10xf32>
    %cst_47 = arith.constant dense<0.000000e+00> : vector<10xf32>
    %117 = vector.multi_reduction <add>, %116, %cst_47 [1] : vector<10x10xf32> to vector<10xf32>
    %118 = vector.shape_cast %117 : vector<10xf32> to vector<10x1xf32>
    %119 = vector.broadcast %118 : vector<10x1xf32> to vector<10x10xf32>
    %120 = arith.divf %116, %119 : vector<10x10xf32>
    %cst_48 = arith.constant dense<0.000000e+00> : vector<10x8xf32>
    %121 = tpu.matmul %120, %107, %cst_48 {dimension_numbers = #tpu.dot_dimension_numbers<[1], [0], [0], [1], [0, 0, 1, 1], [], []>} : vector<10x10xf32>, vector<10x8xf32>, vector<10x8xf32> -> vector<10x8xf32>
    %122 = vector.extract_strided_slice %87 {offsets = [0, 16], sizes = [10, 8], strides = [1, 1]} : vector<10x96xf32> to vector<10x8xf32>
    %123 = vector.extract_strided_slice %87 {offsets = [0, 48], sizes = [10, 8], strides = [1, 1]} : vector<10x96xf32> to vector<10x8xf32>
    %124 = vector.extract_strided_slice %87 {offsets = [0, 80], sizes = [10, 8], strides = [1, 1]} : vector<10x96xf32> to vector<10x8xf32>
    %cst_49 = arith.constant dense<0.000000e+00> : vector<10x10xf32>
    %125 = tpu.matmul %122, %123, %cst_49 {dimension_numbers = #tpu.dot_dimension_numbers<[1], [1], [0], [0], [0, 0, 1, 0], [], []>} : vector<10x8xf32>, vector<10x8xf32>, vector<10x10xf32> -> vector<10x10xf32>
    %cst_50 = arith.constant 0.353553385 : f32
    %126 = vector.broadcast %cst_50 : f32 to vector<10x10xf32>
    %127 = arith.mulf %125, %126 : vector<10x10xf32>
    %128 = arith.addf %127, %58 : vector<10x10xf32>
    %cst_51 = arith.constant dense<0xFF800000> : vector<10xf32>
    %129 = vector.multi_reduction <maximumf>, %128, %cst_51 [1] : vector<10x10xf32> to vector<10xf32>
    %130 = vector.shape_cast %129 : vector<10xf32> to vector<10x1xf32>
    %131 = vector.broadcast %130 : vector<10x1xf32> to vector<10x10xf32>
    %132 = arith.subf %128, %131 : vector<10x10xf32>
    %133 = math.exp %132 : vector<10x10xf32>
    %cst_52 = arith.constant dense<0.000000e+00> : vector<10xf32>
    %134 = vector.multi_reduction <add>, %133, %cst_52 [1] : vector<10x10xf32> to vector<10xf32>
    %135 = vector.shape_cast %134 : vector<10xf32> to vector<10x1xf32>
    %136 = vector.broadcast %135 : vector<10x1xf32> to vector<10x10xf32>
    %137 = arith.divf %133, %136 : vector<10x10xf32>
    %cst_53 = arith.constant dense<0.000000e+00> : vector<10x8xf32>
    %138 = tpu.matmul %137, %124, %cst_53 {dimension_numbers = #tpu.dot_dimension_numbers<[1], [0], [0], [1], [0, 0, 1, 1], [], []>} : vector<10x10xf32>, vector<10x8xf32>, vector<10x8xf32> -> vector<10x8xf32>
    %139 = vector.extract_strided_slice %87 {offsets = [0, 24], sizes = [10, 8], strides = [1, 1]} : vector<10x96xf32> to vector<10x8xf32>
    %140 = vector.extract_strided_slice %87 {offsets = [0, 56], sizes = [10, 8], strides = [1, 1]} : vector<10x96xf32> to vector<10x8xf32>
    %141 = vector.extract_strided_slice %87 {offsets = [0, 88], sizes = [10, 8], strides = [1, 1]} : vector<10x96xf32> to vector<10x8xf32>
    %cst_54 = arith.constant dense<0.000000e+00> : vector<10x10xf32>
    %142 = tpu.matmul %139, %140, %cst_54 {dimension_numbers = #tpu.dot_dimension_numbers<[1], [1], [0], [0], [0, 0, 1, 0], [], []>} : vector<10x8xf32>, vector<10x8xf32>, vector<10x10xf32> -> vector<10x10xf32>
    %cst_55 = arith.constant 0.353553385 : f32
    %143 = vector.broadcast %cst_55 : f32 to vector<10x10xf32>
    %144 = arith.mulf %142, %143 : vector<10x10xf32>
    %145 = arith.addf %144, %58 : vector<10x10xf32>
    %cst_56 = arith.constant dense<0xFF800000> : vector<10xf32>
    %146 = vector.multi_reduction <maximumf>, %145, %cst_56 [1] : vector<10x10xf32> to vector<10xf32>
    %147 = vector.shape_cast %146 : vector<10xf32> to vector<10x1xf32>
    %148 = vector.broadcast %147 : vector<10x1xf32> to vector<10x10xf32>
    %149 = arith.subf %145, %148 : vector<10x10xf32>
    %150 = math.exp %149 : vector<10x10xf32>
    %cst_57 = arith.constant dense<0.000000e+00> : vector<10xf32>
    %151 = vector.multi_reduction <add>, %150, %cst_57 [1] : vector<10x10xf32> to vector<10xf32>
    %152 = vector.shape_cast %151 : vector<10xf32> to vector<10x1xf32>
    %153 = vector.broadcast %152 : vector<10x1xf32> to vector<10x10xf32>
    %154 = arith.divf %150, %153 : vector<10x10xf32>
    %cst_58 = arith.constant dense<0.000000e+00> : vector<10x8xf32>
    %155 = tpu.matmul %154, %141, %cst_58 {dimension_numbers = #tpu.dot_dimension_numbers<[1], [0], [0], [1], [0, 0, 1, 1], [], []>} : vector<10x10xf32>, vector<10x8xf32>, vector<10x8xf32> -> vector<10x8xf32>
    %156 = tpu.concatenate %104, %121, %138, %155 in 1 : vector<10x8xf32>, vector<10x8xf32>, vector<10x8xf32>, vector<10x8xf32> -> vector<10x32xf32>
    %c0_59 = arith.constant 0 : index
    %c0_60 = arith.constant 0 : index
    %c0_61 = arith.constant 0 : index
    %157 = vector.load %arg11[%c0_59, %c0_60, %c0_61] : memref<2x32x32xf32, #tpu.memory_space<vmem>>, vector<1x32x32xf32>
    %158 = vector.shape_cast %157 : vector<1x32x32xf32> to vector<32x32xf32>
    %cst_62 = arith.constant dense<0.000000e+00> : vector<10x32xf32>
    %159 = tpu.matmul %156, %158, %cst_62 {dimension_numbers = #tpu.dot_dimension_numbers<[1], [0], [0], [1], [0, 0, 1, 1], [], []>} : vector<10x32xf32>, vector<32x32xf32>, vector<10x32xf32> -> vector<10x32xf32>
    %160 = arith.addf %57, %159 : vector<10x32xf32>
    %161 = vector.extract_strided_slice %60 {offsets = [2, 0], sizes = [1, 32], strides = [1, 1]} : vector<6x32xf32> to vector<1x32xf32>
    %162 = vector.broadcast %161 : vector<1x32xf32> to vector<10x32xf32>
    %163 = arith.addf %160, %162 : vector<10x32xf32>
    %164 = vector.extract_strided_slice %60 {offsets = [3, 0], sizes = [1, 32], strides = [1, 1]} : vector<6x32xf32> to vector<1x32xf32>
    %165 = vector.extract_strided_slice %60 {offsets = [4, 0], sizes = [1, 32], strides = [1, 1]} : vector<6x32xf32> to vector<1x32xf32>
    %cst_63 = arith.constant dense<0.000000e+00> : vector<10xf32>
    %166 = vector.multi_reduction <add>, %163, %cst_63 [1] : vector<10x32xf32> to vector<10xf32>
    %167 = vector.shape_cast %166 : vector<10xf32> to vector<10x1xf32>
    %cst_64 = arith.constant 3.200000e+01 : f32
    %168 = vector.broadcast %cst_64 : f32 to vector<10x1xf32>
    %169 = arith.divf %167, %168 : vector<10x1xf32>
    %170 = vector.broadcast %169 : vector<10x1xf32> to vector<10x32xf32>
    %171 = arith.subf %163, %170 : vector<10x32xf32>
    %172 = arith.mulf %171, %171 : vector<10x32xf32>
    %cst_65 = arith.constant dense<0.000000e+00> : vector<10xf32>
    %173 = vector.multi_reduction <add>, %172, %cst_65 [1] : vector<10x32xf32> to vector<10xf32>
    %174 = vector.shape_cast %173 : vector<10xf32> to vector<10x1xf32>
    %cst_66 = arith.constant 3.200000e+01 : f32
    %175 = vector.broadcast %cst_66 : f32 to vector<10x1xf32>
    %176 = arith.divf %174, %175 : vector<10x1xf32>
    %177 = vector.broadcast %169 : vector<10x1xf32> to vector<10x32xf32>
    %178 = arith.subf %163, %177 : vector<10x32xf32>
    %cst_67 = arith.constant 9.99999974E-6 : f32
    %179 = vector.broadcast %cst_67 : f32 to vector<10x1xf32>
    %180 = arith.addf %176, %179 : vector<10x1xf32>
    %181 = math.rsqrt %180 : vector<10x1xf32>
    %182 = vector.broadcast %181 : vector<10x1xf32> to vector<10x32xf32>
    %183 = arith.mulf %178, %182 : vector<10x32xf32>
    %184 = vector.broadcast %164 : vector<1x32xf32> to vector<10x32xf32>
    %185 = arith.mulf %183, %184 : vector<10x32xf32>
    %186 = vector.broadcast %165 : vector<1x32xf32> to vector<10x32xf32>
    %187 = arith.addf %185, %186 : vector<10x32xf32>
    %c0_68 = arith.constant 0 : index
    %c0_69 = arith.constant 0 : index
    %c0_70 = arith.constant 0 : index
    %188 = vector.load %arg12[%c0_68, %c0_69, %c0_70] : memref<2x32x64xf32, #tpu.memory_space<vmem>>, vector<1x32x64xf32>
    %189 = vector.shape_cast %188 : vector<1x32x64xf32> to vector<32x64xf32>
    %cst_71 = arith.constant dense<0.000000e+00> : vector<10x64xf32>
    %190 = tpu.matmul %187, %189, %cst_71 {dimension_numbers = #tpu.dot_dimension_numbers<[1], [0], [0], [1], [0, 0, 1, 1], [], []>} : vector<10x32xf32>, vector<32x64xf32>, vector<10x64xf32> -> vector<10x64xf32>
    %c0_72 = arith.constant 0 : index
    %c0_73 = arith.constant 0 : index
    %191 = vector.load %arg13[%c0_72, %c0_73] : memref<2x64xf32, #tpu.memory_space<vmem>>, vector<1x64xf32>
    %192 = vector.broadcast %191 : vector<1x64xf32> to vector<10x64xf32>
    %193 = arith.addf %190, %192 : vector<10x64xf32>
    %194 = arith.mulf %193, %193 : vector<10x64xf32>
    %195 = arith.mulf %193, %194 : vector<10x64xf32>
    %cst_74 = arith.constant 4.471500e-02 : f32
    %196 = vector.broadcast %cst_74 : f32 to vector<10x64xf32>
    %197 = arith.mulf %196, %195 : vector<10x64xf32>
    %198 = arith.addf %193, %197 : vector<10x64xf32>
    %cst_75 = arith.constant 0.797884583 : f32
    %199 = vector.broadcast %cst_75 : f32 to vector<10x64xf32>
    %200 = arith.mulf %199, %198 : vector<10x64xf32>
    %201 = math.tanh %200 : vector<10x64xf32>
    %cst_76 = arith.constant 1.000000e+00 : f32
    %202 = vector.broadcast %cst_76 : f32 to vector<10x64xf32>
    %203 = arith.addf %202, %201 : vector<10x64xf32>
    %cst_77 = arith.constant 5.000000e-01 : f32
    %204 = vector.broadcast %cst_77 : f32 to vector<10x64xf32>
    %205 = arith.mulf %204, %203 : vector<10x64xf32>
    %206 = arith.mulf %193, %205 : vector<10x64xf32>
    %c0_78 = arith.constant 0 : index
    %c0_79 = arith.constant 0 : index
    %c0_80 = arith.constant 0 : index
    %207 = vector.load %arg14[%c0_78, %c0_79, %c0_80] : memref<2x64x32xf32, #tpu.memory_space<vmem>>, vector<1x64x32xf32>
    %208 = vector.shape_cast %207 : vector<1x64x32xf32> to vector<64x32xf32>
    %cst_81 = arith.constant dense<0.000000e+00> : vector<10x32xf32>
    %209 = tpu.matmul %206, %208, %cst_81 {dimension_numbers = #tpu.dot_dimension_numbers<[1], [0], [0], [1], [0, 0, 1, 1], [], []>} : vector<10x64xf32>, vector<64x32xf32>, vector<10x32xf32> -> vector<10x32xf32>
    %210 = arith.addf %163, %209 : vector<10x32xf32>
    %211 = vector.extract_strided_slice %60 {offsets = [5, 0], sizes = [1, 32], strides = [1, 1]} : vector<6x32xf32> to vector<1x32xf32>
    %212 = vector.broadcast %211 : vector<1x32xf32> to vector<10x32xf32>
    %213 = arith.addf %210, %212 : vector<10x32xf32>
    %c1_82 = arith.constant 1 : index
    %c0_83 = arith.constant 0 : index
    %c0_84 = arith.constant 0 : index
    %214 = vector.load %arg9[%c1_82, %c0_83, %c0_84] : memref<2x6x32xf32, #tpu.memory_space<vmem>>, vector<1x6x32xf32>
    %215 = vector.shape_cast %214 : vector<1x6x32xf32> to vector<6x32xf32>
    %216 = vector.extract_strided_slice %215 {offsets = [0, 0], sizes = [1, 32], strides = [1, 1]} : vector<6x32xf32> to vector<1x32xf32>
    %217 = vector.extract_strided_slice %215 {offsets = [1, 0], sizes = [1, 32], strides = [1, 1]} : vector<6x32xf32> to vector<1x32xf32>
    %cst_85 = arith.constant dense<0.000000e+00> : vector<10xf32>
    %218 = vector.multi_reduction <add>, %213, %cst_85 [1] : vector<10x32xf32> to vector<10xf32>
    %219 = vector.shape_cast %218 : vector<10xf32> to vector<10x1xf32>
    %cst_86 = arith.constant 3.200000e+01 : f32
    %220 = vector.broadcast %cst_86 : f32 to vector<10x1xf32>
    %221 = arith.divf %219, %220 : vector<10x1xf32>
    %222 = vector.broadcast %221 : vector<10x1xf32> to vector<10x32xf32>
    %223 = arith.subf %213, %222 : vector<10x32xf32>
    %224 = arith.mulf %223, %223 : vector<10x32xf32>
    %cst_87 = arith.constant dense<0.000000e+00> : vector<10xf32>
    %225 = vector.multi_reduction <add>, %224, %cst_87 [1] : vector<10x32xf32> to vector<10xf32>
    %226 = vector.shape_cast %225 : vector<10xf32> to vector<10x1xf32>
    %cst_88 = arith.constant 3.200000e+01 : f32
    %227 = vector.broadcast %cst_88 : f32 to vector<10x1xf32>
    %228 = arith.divf %226, %227 : vector<10x1xf32>
    %229 = vector.broadcast %221 : vector<10x1xf32> to vector<10x32xf32>
    %230 = arith.subf %213, %229 : vector<10x32xf32>
    %cst_89 = arith.constant 9.99999974E-6 : f32
    %231 = vector.broadcast %cst_89 : f32 to vector<10x1xf32>
    %232 = arith.addf %228, %231 : vector<10x1xf32>
    %233 = math.rsqrt %232 : vector<10x1xf32>
    %234 = vector.broadcast %233 : vector<10x1xf32> to vector<10x32xf32>
    %235 = arith.mulf %230, %234 : vector<10x32xf32>
    %236 = vector.broadcast %216 : vector<1x32xf32> to vector<10x32xf32>
    %237 = arith.mulf %235, %236 : vector<10x32xf32>
    %238 = vector.broadcast %217 : vector<1x32xf32> to vector<10x32xf32>
    %239 = arith.addf %237, %238 : vector<10x32xf32>
    %c1_90 = arith.constant 1 : index
    %c0_91 = arith.constant 0 : index
    %c0_92 = arith.constant 0 : index
    %240 = vector.load %arg10[%c1_90, %c0_91, %c0_92] : memref<2x32x96xf32, #tpu.memory_space<vmem>>, vector<1x32x96xf32>
    %241 = vector.shape_cast %240 : vector<1x32x96xf32> to vector<32x96xf32>
    %cst_93 = arith.constant dense<0.000000e+00> : vector<10x96xf32>
    %242 = tpu.matmul %239, %241, %cst_93 {dimension_numbers = #tpu.dot_dimension_numbers<[1], [0], [0], [1], [0, 0, 1, 1], [], []>} : vector<10x32xf32>, vector<32x96xf32>, vector<10x96xf32> -> vector<10x96xf32>
    %243 = vector.extract_strided_slice %242 {offsets = [0, 0], sizes = [10, 8], strides = [1, 1]} : vector<10x96xf32> to vector<10x8xf32>
    %244 = vector.extract_strided_slice %242 {offsets = [0, 32], sizes = [10, 8], strides = [1, 1]} : vector<10x96xf32> to vector<10x8xf32>
    %245 = vector.extract_strided_slice %242 {offsets = [0, 64], sizes = [10, 8], strides = [1, 1]} : vector<10x96xf32> to vector<10x8xf32>
    %cst_94 = arith.constant dense<0.000000e+00> : vector<10x10xf32>
    %246 = tpu.matmul %243, %244, %cst_94 {dimension_numbers = #tpu.dot_dimension_numbers<[1], [1], [0], [0], [0, 0, 1, 0], [], []>} : vector<10x8xf32>, vector<10x8xf32>, vector<10x10xf32> -> vector<10x10xf32>
    %cst_95 = arith.constant 0.353553385 : f32
    %247 = vector.broadcast %cst_95 : f32 to vector<10x10xf32>
    %248 = arith.mulf %246, %247 : vector<10x10xf32>
    %249 = arith.addf %248, %58 : vector<10x10xf32>
    %cst_96 = arith.constant dense<0xFF800000> : vector<10xf32>
    %250 = vector.multi_reduction <maximumf>, %249, %cst_96 [1] : vector<10x10xf32> to vector<10xf32>
    %251 = vector.shape_cast %250 : vector<10xf32> to vector<10x1xf32>
    %252 = vector.broadcast %251 : vector<10x1xf32> to vector<10x10xf32>
    %253 = arith.subf %249, %252 : vector<10x10xf32>
    %254 = math.exp %253 : vector<10x10xf32>
    %cst_97 = arith.constant dense<0.000000e+00> : vector<10xf32>
    %255 = vector.multi_reduction <add>, %254, %cst_97 [1] : vector<10x10xf32> to vector<10xf32>
    %256 = vector.shape_cast %255 : vector<10xf32> to vector<10x1xf32>
    %257 = vector.broadcast %256 : vector<10x1xf32> to vector<10x10xf32>
    %258 = arith.divf %254, %257 : vector<10x10xf32>
    %cst_98 = arith.constant dense<0.000000e+00> : vector<10x8xf32>
    %259 = tpu.matmul %258, %245, %cst_98 {dimension_numbers = #tpu.dot_dimension_numbers<[1], [0], [0], [1], [0, 0, 1, 1], [], []>} : vector<10x10xf32>, vector<10x8xf32>, vector<10x8xf32> -> vector<10x8xf32>
    %260 = vector.extract_strided_slice %242 {offsets = [0, 8], sizes = [10, 8], strides = [1, 1]} : vector<10x96xf32> to vector<10x8xf32>
    %261 = vector.extract_strided_slice %242 {offsets = [0, 40], sizes = [10, 8], strides = [1, 1]} : vector<10x96xf32> to vector<10x8xf32>
    %262 = vector.extract_strided_slice %242 {offsets = [0, 72], sizes = [10, 8], strides = [1, 1]} : vector<10x96xf32> to vector<10x8xf32>
    %cst_99 = arith.constant dense<0.000000e+00> : vector<10x10xf32>
    %263 = tpu.matmul %260, %261, %cst_99 {dimension_numbers = #tpu.dot_dimension_numbers<[1], [1], [0], [0], [0, 0, 1, 0], [], []>} : vector<10x8xf32>, vector<10x8xf32>, vector<10x10xf32> -> vector<10x10xf32>
    %cst_100 = arith.constant 0.353553385 : f32
    %264 = vector.broadcast %cst_100 : f32 to vector<10x10xf32>
    %265 = arith.mulf %263, %264 : vector<10x10xf32>
    %266 = arith.addf %265, %58 : vector<10x10xf32>
    %cst_101 = arith.constant dense<0xFF800000> : vector<10xf32>
    %267 = vector.multi_reduction <maximumf>, %266, %cst_101 [1] : vector<10x10xf32> to vector<10xf32>
    %268 = vector.shape_cast %267 : vector<10xf32> to vector<10x1xf32>
    %269 = vector.broadcast %268 : vector<10x1xf32> to vector<10x10xf32>
    %270 = arith.subf %266, %269 : vector<10x10xf32>
    %271 = math.exp %270 : vector<10x10xf32>
    %cst_102 = arith.constant dense<0.000000e+00> : vector<10xf32>
    %272 = vector.multi_reduction <add>, %271, %cst_102 [1] : vector<10x10xf32> to vector<10xf32>
    %273 = vector.shape_cast %272 : vector<10xf32> to vector<10x1xf32>
    %274 = vector.broadcast %273 : vector<10x1xf32> to vector<10x10xf32>
    %275 = arith.divf %271, %274 : vector<10x10xf32>
    %cst_103 = arith.constant dense<0.000000e+00> : vector<10x8xf32>
    %276 = tpu.matmul %275, %262, %cst_103 {dimension_numbers = #tpu.dot_dimension_numbers<[1], [0], [0], [1], [0, 0, 1, 1], [], []>} : vector<10x10xf32>, vector<10x8xf32>, vector<10x8xf32> -> vector<10x8xf32>
    %277 = vector.extract_strided_slice %242 {offsets = [0, 16], sizes = [10, 8], strides = [1, 1]} : vector<10x96xf32> to vector<10x8xf32>
    %278 = vector.extract_strided_slice %242 {offsets = [0, 48], sizes = [10, 8], strides = [1, 1]} : vector<10x96xf32> to vector<10x8xf32>
    %279 = vector.extract_strided_slice %242 {offsets = [0, 80], sizes = [10, 8], strides = [1, 1]} : vector<10x96xf32> to vector<10x8xf32>
    %cst_104 = arith.constant dense<0.000000e+00> : vector<10x10xf32>
    %280 = tpu.matmul %277, %278, %cst_104 {dimension_numbers = #tpu.dot_dimension_numbers<[1], [1], [0], [0], [0, 0, 1, 0], [], []>} : vector<10x8xf32>, vector<10x8xf32>, vector<10x10xf32> -> vector<10x10xf32>
    %cst_105 = arith.constant 0.353553385 : f32
    %281 = vector.broadcast %cst_105 : f32 to vector<10x10xf32>
    %282 = arith.mulf %280, %281 : vector<10x10xf32>
    %283 = arith.addf %282, %58 : vector<10x10xf32>
    %cst_106 = arith.constant dense<0xFF800000> : vector<10xf32>
    %284 = vector.multi_reduction <maximumf>, %283, %cst_106 [1] : vector<10x10xf32> to vector<10xf32>
    %285 = vector.shape_cast %284 : vector<10xf32> to vector<10x1xf32>
    %286 = vector.broadcast %285 : vector<10x1xf32> to vector<10x10xf32>
    %287 = arith.subf %283, %286 : vector<10x10xf32>
    %288 = math.exp %287 : vector<10x10xf32>
    %cst_107 = arith.constant dense<0.000000e+00> : vector<10xf32>
    %289 = vector.multi_reduction <add>, %288, %cst_107 [1] : vector<10x10xf32> to vector<10xf32>
    %290 = vector.shape_cast %289 : vector<10xf32> to vector<10x1xf32>
    %291 = vector.broadcast %290 : vector<10x1xf32> to vector<10x10xf32>
    %292 = arith.divf %288, %291 : vector<10x10xf32>
    %cst_108 = arith.constant dense<0.000000e+00> : vector<10x8xf32>
    %293 = tpu.matmul %292, %279, %cst_108 {dimension_numbers = #tpu.dot_dimension_numbers<[1], [0], [0], [1], [0, 0, 1, 1], [], []>} : vector<10x10xf32>, vector<10x8xf32>, vector<10x8xf32> -> vector<10x8xf32>
    %294 = vector.extract_strided_slice %242 {offsets = [0, 24], sizes = [10, 8], strides = [1, 1]} : vector<10x96xf32> to vector<10x8xf32>
    %295 = vector.extract_strided_slice %242 {offsets = [0, 56], sizes = [10, 8], strides = [1, 1]} : vector<10x96xf32> to vector<10x8xf32>
    %296 = vector.extract_strided_slice %242 {offsets = [0, 88], sizes = [10, 8], strides = [1, 1]} : vector<10x96xf32> to vector<10x8xf32>
    %cst_109 = arith.constant dense<0.000000e+00> : vector<10x10xf32>
    %297 = tpu.matmul %294, %295, %cst_109 {dimension_numbers = #tpu.dot_dimension_numbers<[1], [1], [0], [0], [0, 0, 1, 0], [], []>} : vector<10x8xf32>, vector<10x8xf32>, vector<10x10xf32> -> vector<10x10xf32>
    %cst_110 = arith.constant 0.353553385 : f32
    %298 = vector.broadcast %cst_110 : f32 to vector<10x10xf32>
    %299 = arith.mulf %297, %298 : vector<10x10xf32>
    %300 = arith.addf %299, %58 : vector<10x10xf32>
    %cst_111 = arith.constant dense<0xFF800000> : vector<10xf32>
    %301 = vector.multi_reduction <maximumf>, %300, %cst_111 [1] : vector<10x10xf32> to vector<10xf32>
    %302 = vector.shape_cast %301 : vector<10xf32> to vector<10x1xf32>
    %303 = vector.broadcast %302 : vector<10x1xf32> to vector<10x10xf32>
    %304 = arith.subf %300, %303 : vector<10x10xf32>
    %305 = math.exp %304 : vector<10x10xf32>
    %cst_112 = arith.constant dense<0.000000e+00> : vector<10xf32>
    %306 = vector.multi_reduction <add>, %305, %cst_112 [1] : vector<10x10xf32> to vector<10xf32>
    %307 = vector.shape_cast %306 : vector<10xf32> to vector<10x1xf32>
    %308 = vector.broadcast %307 : vector<10x1xf32> to vector<10x10xf32>
    %309 = arith.divf %305, %308 : vector<10x10xf32>
    %cst_113 = arith.constant dense<0.000000e+00> : vector<10x8xf32>
    %310 = tpu.matmul %309, %296, %cst_113 {dimension_numbers = #tpu.dot_dimension_numbers<[1], [0], [0], [1], [0, 0, 1, 1], [], []>} : vector<10x10xf32>, vector<10x8xf32>, vector<10x8xf32> -> vector<10x8xf32>
    %311 = tpu.concatenate %259, %276, %293, %310 in 1 : vector<10x8xf32>, vector<10x8xf32>, vector<10x8xf32>, vector<10x8xf32> -> vector<10x32xf32>
    %c1_114 = arith.constant 1 : index
    %c0_115 = arith.constant 0 : index
    %c0_116 = arith.constant 0 : index
    %312 = vector.load %arg11[%c1_114, %c0_115, %c0_116] : memref<2x32x32xf32, #tpu.memory_space<vmem>>, vector<1x32x32xf32>
    %313 = vector.shape_cast %312 : vector<1x32x32xf32> to vector<32x32xf32>
    %cst_117 = arith.constant dense<0.000000e+00> : vector<10x32xf32>
    %314 = tpu.matmul %311, %313, %cst_117 {dimension_numbers = #tpu.dot_dimension_numbers<[1], [0], [0], [1], [0, 0, 1, 1], [], []>} : vector<10x32xf32>, vector<32x32xf32>, vector<10x32xf32> -> vector<10x32xf32>
    %315 = arith.addf %213, %314 : vector<10x32xf32>
    %316 = vector.extract_strided_slice %215 {offsets = [2, 0], sizes = [1, 32], strides = [1, 1]} : vector<6x32xf32> to vector<1x32xf32>
    %317 = vector.broadcast %316 : vector<1x32xf32> to vector<10x32xf32>
    %318 = arith.addf %315, %317 : vector<10x32xf32>
    %319 = vector.extract_strided_slice %215 {offsets = [3, 0], sizes = [1, 32], strides = [1, 1]} : vector<6x32xf32> to vector<1x32xf32>
    %320 = vector.extract_strided_slice %215 {offsets = [4, 0], sizes = [1, 32], strides = [1, 1]} : vector<6x32xf32> to vector<1x32xf32>
    %cst_118 = arith.constant dense<0.000000e+00> : vector<10xf32>
    %321 = vector.multi_reduction <add>, %318, %cst_118 [1] : vector<10x32xf32> to vector<10xf32>
    %322 = vector.shape_cast %321 : vector<10xf32> to vector<10x1xf32>
    %cst_119 = arith.constant 3.200000e+01 : f32
    %323 = vector.broadcast %cst_119 : f32 to vector<10x1xf32>
    %324 = arith.divf %322, %323 : vector<10x1xf32>
    %325 = vector.broadcast %324 : vector<10x1xf32> to vector<10x32xf32>
    %326 = arith.subf %318, %325 : vector<10x32xf32>
    %327 = arith.mulf %326, %326 : vector<10x32xf32>
    %cst_120 = arith.constant dense<0.000000e+00> : vector<10xf32>
    %328 = vector.multi_reduction <add>, %327, %cst_120 [1] : vector<10x32xf32> to vector<10xf32>
    %329 = vector.shape_cast %328 : vector<10xf32> to vector<10x1xf32>
    %cst_121 = arith.constant 3.200000e+01 : f32
    %330 = vector.broadcast %cst_121 : f32 to vector<10x1xf32>
    %331 = arith.divf %329, %330 : vector<10x1xf32>
    %332 = vector.broadcast %324 : vector<10x1xf32> to vector<10x32xf32>
    %333 = arith.subf %318, %332 : vector<10x32xf32>
    %cst_122 = arith.constant 9.99999974E-6 : f32
    %334 = vector.broadcast %cst_122 : f32 to vector<10x1xf32>
    %335 = arith.addf %331, %334 : vector<10x1xf32>
    %336 = math.rsqrt %335 : vector<10x1xf32>
    %337 = vector.broadcast %336 : vector<10x1xf32> to vector<10x32xf32>
    %338 = arith.mulf %333, %337 : vector<10x32xf32>
    %339 = vector.broadcast %319 : vector<1x32xf32> to vector<10x32xf32>
    %340 = arith.mulf %338, %339 : vector<10x32xf32>
    %341 = vector.broadcast %320 : vector<1x32xf32> to vector<10x32xf32>
    %342 = arith.addf %340, %341 : vector<10x32xf32>
    %c1_123 = arith.constant 1 : index
    %c0_124 = arith.constant 0 : index
    %c0_125 = arith.constant 0 : index
    %343 = vector.load %arg12[%c1_123, %c0_124, %c0_125] : memref<2x32x64xf32, #tpu.memory_space<vmem>>, vector<1x32x64xf32>
    %344 = vector.shape_cast %343 : vector<1x32x64xf32> to vector<32x64xf32>
    %cst_126 = arith.constant dense<0.000000e+00> : vector<10x64xf32>
    %345 = tpu.matmul %342, %344, %cst_126 {dimension_numbers = #tpu.dot_dimension_numbers<[1], [0], [0], [1], [0, 0, 1, 1], [], []>} : vector<10x32xf32>, vector<32x64xf32>, vector<10x64xf32> -> vector<10x64xf32>
    %c1_127 = arith.constant 1 : index
    %c0_128 = arith.constant 0 : index
    %346 = vector.load %arg13[%c1_127, %c0_128] : memref<2x64xf32, #tpu.memory_space<vmem>>, vector<1x64xf32>
    %347 = vector.broadcast %346 : vector<1x64xf32> to vector<10x64xf32>
    %348 = arith.addf %345, %347 : vector<10x64xf32>
    %349 = arith.mulf %348, %348 : vector<10x64xf32>
    %350 = arith.mulf %348, %349 : vector<10x64xf32>
    %cst_129 = arith.constant 4.471500e-02 : f32
    %351 = vector.broadcast %cst_129 : f32 to vector<10x64xf32>
    %352 = arith.mulf %351, %350 : vector<10x64xf32>
    %353 = arith.addf %348, %352 : vector<10x64xf32>
    %cst_130 = arith.constant 0.797884583 : f32
    %354 = vector.broadcast %cst_130 : f32 to vector<10x64xf32>
    %355 = arith.mulf %354, %353 : vector<10x64xf32>
    %356 = math.tanh %355 : vector<10x64xf32>
    %cst_131 = arith.constant 1.000000e+00 : f32
    %357 = vector.broadcast %cst_131 : f32 to vector<10x64xf32>
    %358 = arith.addf %357, %356 : vector<10x64xf32>
    %cst_132 = arith.constant 5.000000e-01 : f32
    %359 = vector.broadcast %cst_132 : f32 to vector<10x64xf32>
    %360 = arith.mulf %359, %358 : vector<10x64xf32>
    %361 = arith.mulf %348, %360 : vector<10x64xf32>
    %c1_133 = arith.constant 1 : index
    %c0_134 = arith.constant 0 : index
    %c0_135 = arith.constant 0 : index
    %362 = vector.load %arg14[%c1_133, %c0_134, %c0_135] : memref<2x64x32xf32, #tpu.memory_space<vmem>>, vector<1x64x32xf32>
    %363 = vector.shape_cast %362 : vector<1x64x32xf32> to vector<64x32xf32>
    %cst_136 = arith.constant dense<0.000000e+00> : vector<10x32xf32>
    %364 = tpu.matmul %361, %363, %cst_136 {dimension_numbers = #tpu.dot_dimension_numbers<[1], [0], [0], [1], [0, 0, 1, 1], [], []>} : vector<10x64xf32>, vector<64x32xf32>, vector<10x32xf32> -> vector<10x32xf32>
    %365 = arith.addf %318, %364 : vector<10x32xf32>
    %366 = vector.extract_strided_slice %215 {offsets = [5, 0], sizes = [1, 32], strides = [1, 1]} : vector<6x32xf32> to vector<1x32xf32>
    %367 = vector.broadcast %366 : vector<1x32xf32> to vector<10x32xf32>
    %368 = arith.addf %365, %367 : vector<10x32xf32>
    %c3 = arith.constant 3 : index
    %c0_137 = arith.constant 0 : index
    %369 = vector.load %arg4[%c3, %c0_137] : memref<5x32xf32, #tpu.memory_space<vmem>>, vector<1x32xf32>
    %c4 = arith.constant 4 : index
    %c0_138 = arith.constant 0 : index
    %370 = vector.load %arg4[%c4, %c0_138] : memref<5x32xf32, #tpu.memory_space<vmem>>, vector<1x32xf32>
    %cst_139 = arith.constant dense<0.000000e+00> : vector<10xf32>
    %371 = vector.multi_reduction <add>, %368, %cst_139 [1] : vector<10x32xf32> to vector<10xf32>
    %372 = vector.shape_cast %371 : vector<10xf32> to vector<10x1xf32>
    %cst_140 = arith.constant 3.200000e+01 : f32
    %373 = vector.broadcast %cst_140 : f32 to vector<10x1xf32>
    %374 = arith.divf %372, %373 : vector<10x1xf32>
    %375 = vector.broadcast %374 : vector<10x1xf32> to vector<10x32xf32>
    %376 = arith.subf %368, %375 : vector<10x32xf32>
    %377 = arith.mulf %376, %376 : vector<10x32xf32>
    %cst_141 = arith.constant dense<0.000000e+00> : vector<10xf32>
    %378 = vector.multi_reduction <add>, %377, %cst_141 [1] : vector<10x32xf32> to vector<10xf32>
    %379 = vector.shape_cast %378 : vector<10xf32> to vector<10x1xf32>
    %cst_142 = arith.constant 3.200000e+01 : f32
    %380 = vector.broadcast %cst_142 : f32 to vector<10x1xf32>
    %381 = arith.divf %379, %380 : vector<10x1xf32>
    %382 = vector.broadcast %374 : vector<10x1xf32> to vector<10x32xf32>
    %383 = arith.subf %368, %382 : vector<10x32xf32>
    %cst_143 = arith.constant 9.99999974E-6 : f32
    %384 = vector.broadcast %cst_143 : f32 to vector<10x1xf32>
    %385 = arith.addf %381, %384 : vector<10x1xf32>
    %386 = math.rsqrt %385 : vector<10x1xf32>
    %387 = vector.broadcast %386 : vector<10x1xf32> to vector<10x32xf32>
    %388 = arith.mulf %383, %387 : vector<10x32xf32>
    %389 = vector.broadcast %369 : vector<1x32xf32> to vector<10x32xf32>
    %390 = arith.mulf %388, %389 : vector<10x32xf32>
    %391 = vector.broadcast %370 : vector<1x32xf32> to vector<10x32xf32>
    %392 = arith.addf %390, %391 : vector<10x32xf32>
    %c0_144 = arith.constant 0 : index
    %c0_145 = arith.constant 0 : index
    %393 = vector.load %arg16[%c0_144, %c0_145] : memref<10x32xf32, #tpu.memory_space<vmem>>, vector<10x32xf32>
    tpu.vector_store %arg16[%c0_144, %c0_145], %392 {strides = array<i32>} : memref<10x32xf32, #tpu.memory_space<vmem>>, vector<10x32xf32>,
    %c0_146 = arith.constant 0 : index
    %c0_147 = arith.constant 0 : index
    %394 = vector.load %arg8[%c0_146, %c0_147] : memref<2x10xf32, #tpu.memory_space<vmem>>, vector<2x10xf32>
    %cst_148 = arith.constant dense<0.000000e+00> : vector<2x32xf32>
    %395 = tpu.matmul %394, %392, %cst_148 {dimension_numbers = #tpu.dot_dimension_numbers<[1], [0], [0], [1], [0, 0, 1, 1], [], []>} : vector<2x10xf32>, vector<10x32xf32>, vector<2x32xf32> -> vector<2x32xf32>
    %c0_149 = arith.constant 0 : index
    %c0_150 = arith.constant 0 : index
    %396 = vector.load %arg15[%c0_149, %c0_150] : memref<33x128xf32, #tpu.memory_space<vmem>>, vector<32x128xf32>
    %cst_151 = arith.constant dense<0.000000e+00> : vector<2x128xf32>
    %397 = tpu.matmul %395, %396, %cst_151 {dimension_numbers = #tpu.dot_dimension_numbers<[1], [0], [0], [1], [0, 0, 1, 1], [], []>} : vector<2x32xf32>, vector<32x128xf32>, vector<2x128xf32> -> vector<2x128xf32>
    %c32 = arith.constant 32 : index
    %c0_152 = arith.constant 0 : index
    %398 = vector.load %arg15[%c32, %c0_152] : memref<33x128xf32, #tpu.memory_space<vmem>>, vector<1x128xf32>
    %399 = vector.broadcast %398 : vector<1x128xf32> to vector<2x128xf32>
    %400 = arith.addf %397, %399 : vector<2x128xf32>
    %c0_153 = arith.constant 0 : index
    %c0_154 = arith.constant 0 : index
    %401 = vector.load %arg17[%c0_153, %c0_154] : memref<2x128xf32, #tpu.memory_space<vmem>>, vector<2x128xf32>
    tpu.vector_store %arg17[%c0_153, %c0_154], %400 {strides = array<i32>} : memref<2x128xf32, #tpu.memory_space<vmem>>, vector<2x128xf32>,
    return
  }
  func.func @transform_0(%arg0: i32) -> (i32, i32) {
    %c0_i32 = arith.constant 0 : i32
    %c0_i32_0 = arith.constant 0 : i32
    return %arg0, %c0_i32 : i32, i32
  }
  func.func @transform_1(%arg0: i32) -> (i32, i32) {
    %c0_i32 = arith.constant 0 : i32
    %c0_i32_0 = arith.constant 0 : i32
    %c0_i32_1 = arith.constant 0 : i32
    return %c0_i32, %c0_i32_0 : i32, i32
  }
  func.func @transform_2(%arg0: i32) -> (i32, i32) {
    %c0_i32 = arith.constant 0 : i32
    %c0_i32_0 = arith.constant 0 : i32
    %c0_i32_1 = arith.constant 0 : i32
    return %c0_i32, %c0_i32_0 : i32, i32
  }
  func.func @transform_3(%arg0: i32) -> (i32, i32) {
    %c0_i32 = arith.constant 0 : i32
    %c0_i32_0 = arith.constant 0 : i32
    %c0_i32_1 = arith.constant 0 : i32
    return %c0_i32, %c0_i32_0 : i32, i32
  }
  func.func @transform_4(%arg0: i32) -> (i32, i32) {
    %c0_i32 = arith.constant 0 : i32
    %c0_i32_0 = arith.constant 0 : i32
    %c0_i32_1 = arith.constant 0 : i32
    return %c0_i32, %c0_i32_0 : i32, i32
  }
  func.func @transform_5(%arg0: i32) -> (i32, i32) {
    %c0_i32 = arith.constant 0 : i32
    %c0_i32_0 = arith.constant 0 : i32
    %c0_i32_1 = arith.constant 0 : i32
    return %c0_i32, %c0_i32_0 : i32, i32
  }
  func.func @transform_6(%arg0: i32) -> (i32, i32) {
    %c0_i32 = arith.constant 0 : i32
    %c0_i32_0 = arith.constant 0 : i32
    %c0_i32_1 = arith.constant 0 : i32
    return %c0_i32, %c0_i32_0 : i32, i32
  }
  func.func @transform_7(%arg0: i32) -> (i32, i32) {
    %c0_i32 = arith.constant 0 : i32
    %c0_i32_0 = arith.constant 0 : i32
    %c0_i32_1 = arith.constant 0 : i32
    return %c0_i32, %c0_i32_0 : i32, i32
  }
  func.func @transform_8(%arg0: i32) -> (i32, i32, i32) {
    %c0_i32 = arith.constant 0 : i32
    %c0_i32_0 = arith.constant 0 : i32
    %c0_i32_1 = arith.constant 0 : i32
    %c0_i32_2 = arith.constant 0 : i32
    return %c0_i32, %c0_i32_0, %c0_i32_1 : i32, i32, i32
  }
  func.func @transform_9(%arg0: i32) -> (i32, i32, i32) {
    %c0_i32 = arith.constant 0 : i32
    %c0_i32_0 = arith.constant 0 : i32
    %c0_i32_1 = arith.constant 0 : i32
    %c0_i32_2 = arith.constant 0 : i32
    return %c0_i32, %c0_i32_0, %c0_i32_1 : i32, i32, i32
  }
  func.func @transform_10(%arg0: i32) -> (i32, i32, i32) {
    %c0_i32 = arith.constant 0 : i32
    %c0_i32_0 = arith.constant 0 : i32
    %c0_i32_1 = arith.constant 0 : i32
    %c0_i32_2 = arith.constant 0 : i32
    return %c0_i32, %c0_i32_0, %c0_i32_1 : i32, i32, i32
  }
  func.func @transform_11(%arg0: i32) -> (i32, i32, i32) {
    %c0_i32 = arith.constant 0 : i32
    %c0_i32_0 = arith.constant 0 : i32
    %c0_i32_1 = arith.constant 0 : i32
    %c0_i32_2 = arith.constant 0 : i32
    return %c0_i32, %c0_i32_0, %c0_i32_1 : i32, i32, i32
  }
  func.func @transform_12(%arg0: i32) -> (i32, i32) {
    %c0_i32 = arith.constant 0 : i32
    %c0_i32_0 = arith.constant 0 : i32
    %c0_i32_1 = arith.constant 0 : i32
    return %c0_i32, %c0_i32_0 : i32, i32
  }
  func.func @transform_13(%arg0: i32) -> (i32, i32, i32) {
    %c0_i32 = arith.constant 0 : i32
    %c0_i32_0 = arith.constant 0 : i32
    %c0_i32_1 = arith.constant 0 : i32
    %c0_i32_2 = arith.constant 0 : i32
    return %c0_i32, %c0_i32_0, %c0_i32_1 : i32, i32, i32
  }
  func.func @transform_14(%arg0: i32) -> (i32, i32) {
    %c0_i32 = arith.constant 0 : i32
    %c0_i32_0 = arith.constant 0 : i32
    %c0_i32_1 = arith.constant 0 : i32
    return %c0_i32, %c0_i32_0 : i32, i32
  }
  func.func @transform_15(%arg0: i32) -> (i32, i32) {
    %c0_i32 = arith.constant 0 : i32
    %c0_i32_0 = arith.constant 0 : i32
    return %arg0, %c0_i32 : i32, i32
  }
  func.func @transform_16(%arg0: i32) -> (i32, i32) {
    %c0_i32 = arith.constant 0 : i32
    %c0_i32_0 = arith.constant 0 : i32
    return %arg0, %c0_i32 : i32, i32
  }
}

</mosaic_0001>

<llo_original>
// kernel: tile.9
$region0: #{tile.9}
  %s0 = inlined_call_operand.vmem [shape: f32[2,5,32], index: 0, kind: input, shape index: {}]
  %s1 = inlined_call_operand.vmem [shape: f32[10,32], index: 1, kind: output, shape index: {}]
  %v2 = vld [vmem:[%s0] sm:$0x1f]
  %vm3 = vcmask 261120
  %4 = vst.msk [vmem:[%s1] sm:$0x1f] %vm3, %v2
  %s5 = scalar_lea.vmem %s0, 8
  %v6 = vld [vmem:[%s5] sm:$0x1f]
  %vm7 = vcmask 261120
  %s8 = scalar_lea.vmem %s1, 5
  %9 = vst.msk [vmem:[%s8] sm:$0x1f] %vm7, %v6

// kernel: vit_forward.1
$region0: #{vit_forward.1}
  #allocation0 [shape = 'u32[]', space=smem, size = 0x4, offset = 0x4, fixed_abs, tag = 'smem constant byte address 0x4 - core index']
  #allocation1 [shape = 'u32[72,128]{1,0:T(1,128)}', space=vmem, size = 0x9000, scoped, tag = 'internal scratch']
  %s0 = inlined_call_operand.vmem [shape: f32[10,192], index: 0, kind: input, shape index: {}]
  %s1 = inlined_call_operand.vmem [shape: f32[2,192], index: 1, kind: input, shape index: {}]
  %s2 = inlined_call_operand.vmem [shape: f32[192,32], index: 2, kind: input, shape index: {}]
  %s3 = inlined_call_operand.vmem [shape: f32[5,32], index: 3, kind: input, shape index: {}]
  %s4 = inlined_call_operand.vmem [shape: f32[10,32], index: 4, kind: input, shape index: {}]
  %s5 = inlined_call_operand.vmem [shape: f32[10,32], index: 5, kind: input, shape index: {}]
  %s6 = inlined_call_operand.vmem [shape: f32[10,10], index: 6, kind: input, shape index: {}]
  %s7 = inlined_call_operand.vmem [shape: f32[2,10], index: 7, kind: input, shape index: {}]
  %s8 = inlined_call_operand.vmem [shape: f32[2,6,32], index: 8, kind: input, shape index: {}]
  %s9 = inlined_call_operand.vmem [shape: f32[2,32,96], index: 9, kind: input, shape index: {}]
  %s10 = inlined_call_operand.vmem [shape: f32[2,32,32], index: 10, kind: input, shape index: {}]
  %s11 = inlined_call_operand.vmem [shape: f32[2,32,64], index: 11, kind: input, shape index: {}]
  %s12 = inlined_call_operand.vmem [shape: f32[2,64], index: 12, kind: input, shape index: {}]
  %s13 = inlined_call_operand.vmem [shape: f32[2,64,32], index: 13, kind: input, shape index: {}]
  %s14 = inlined_call_operand.vmem [shape: f32[33,128], index: 14, kind: input, shape index: {}]
  %s15 = inlined_call_operand.vmem [shape: f32[10,32], index: 15, kind: output, shape index: {0}]
  %s16 = inlined_call_operand.hbm [shape: f32[2,128], index: 16, kind: output, shape index: {1}]
  %17 = xla_tuple %s15, %s16
  %s18 = sld [smem:[#allocation0]]
  $region78: #{vit_forward.1} parent=0
    _
  %s20 = ssub.s32 1, %s18
  %s21 = scalar_select 0, %s20, %s18
  $region1: #{vit_forward.1} parent=0
    #allocation2 [shape = 'u8[1024]{0}', space=vmem, size = 0x400, scoped, tag = 'output window, operand 1, single buffered']
    #allocation3 [shape = 's32[1]{0}', space=sflag, size = 0x4, scoped, tag = 'scoped memory for vit_forward.1']
    %22 = vsyncpa [#allocation3], 0
    // Predicated region
    $region2: #{vit_forward.1} parent=1 // pred_check
      _
    $region3: #{vit_forward.1} parent=1 // pred_check_branch
      %24 = sbr.rel (0) target = $region5
    $region4: #{vit_forward.1} parent=1 // pred_region
      _
    $region5: #{vit_forward.1} parent=1 // pred_fallthru
      _
    // Predicated region
    $region6: #{vit_forward.1} parent=1 // pred_check
      _
    $region7: #{vit_forward.1} parent=1 // pred_check_branch
      %26 = sbr.rel (0) target = $region9
    $region8: #{vit_forward.1} parent=1 // pred_region
      _
    $region9: #{vit_forward.1} parent=1 // pred_fallthru
      _
    // Predicated region
    $region10: #{vit_forward.1} parent=1 // pred_check
      _
    $region11: #{vit_forward.1} parent=1 // pred_check_branch
      %28 = sbr.rel (0) target = $region13
    $region12: #{vit_forward.1} parent=1 // pred_region
      _
    $region13: #{vit_forward.1} parent=1 // pred_fallthru
      _
    // Predicated region
    $region14: #{vit_forward.1} parent=1 // pred_check
      _
    $region15: #{vit_forward.1} parent=1 // pred_check_branch
      %30 = sbr.rel (0) target = $region17
    $region16: #{vit_forward.1} parent=1 // pred_region
      _
    $region17: #{vit_forward.1} parent=1 // pred_fallthru
      _
    // Predicated region
    $region18: #{vit_forward.1} parent=1 // pred_check
      _
    $region19: #{vit_forward.1} parent=1 // pred_check_branch
      %32 = sbr.rel (0) target = $region21
    $region20: #{vit_forward.1} parent=1 // pred_region
      _
    $region21: #{vit_forward.1} parent=1 // pred_fallthru
      _
    // Predicated region
    $region22: #{vit_forward.1} parent=1 // pred_check
      _
    $region23: #{vit_forward.1} parent=1 // pred_check_branch
      %34 = sbr.rel (0) target = $region25
    $region24: #{vit_forward.1} parent=1 // pred_region
      _
    $region25: #{vit_forward.1} parent=1 // pred_fallthru
      _
    // Predicated region
    $region26: #{vit_forward.1} parent=1 // pred_check
      _
    $region27: #{vit_forward.1} parent=1 // pred_check_branch
      %36 = sbr.rel (0) target = $region29
    $region28: #{vit_forward.1} parent=1 // pred_region
      _
    $region29: #{vit_forward.1} parent=1 // pred_fallthru
      _
    // Predicated region
    $region30: #{vit_forward.1} parent=1 // pred_check
      _
    $region31: #{vit_forward.1} parent=1 // pred_check_branch
      %38 = sbr.rel (0) target = $region33
    $region32: #{vit_forward.1} parent=1 // pred_region
      _
    $region33: #{vit_forward.1} parent=1 // pred_fallthru
      _
    // Predicated region
    $region34: #{vit_forward.1} parent=1 // pred_check
      _
    $region35: #{vit_forward.1} parent=1 // pred_check_branch
      %40 = sbr.rel (0) target = $region37
    $region36: #{vit_forward.1} parent=1 // pred_region
      _
    $region37: #{vit_forward.1} parent=1 // pred_fallthru
      _
    // Predicated region
    $region38: #{vit_forward.1} parent=1 // pred_check
      _
    $region39: #{vit_forward.1} parent=1 // pred_check_branch
      %42 = sbr.rel (0) target = $region41
    $region40: #{vit_forward.1} parent=1 // pred_region
      _
    $region41: #{vit_forward.1} parent=1 // pred_fallthru
      _
    // Predicated region
    $region42: #{vit_forward.1} parent=1 // pred_check
      _
    $region43: #{vit_forward.1} parent=1 // pred_check_branch
      %44 = sbr.rel (0) target = $region45
    $region44: #{vit_forward.1} parent=1 // pred_region
      _
    $region45: #{vit_forward.1} parent=1 // pred_fallthru
      _
    // Predicated region
    $region46: #{vit_forward.1} parent=1 // pred_check
      _
    $region47: #{vit_forward.1} parent=1 // pred_check_branch
      %46 = sbr.rel (0) target = $region49
    $region48: #{vit_forward.1} parent=1 // pred_region
      _
    $region49: #{vit_forward.1} parent=1 // pred_fallthru
      _
    // Predicated region
    $region50: #{vit_forward.1} parent=1 // pred_check
      _
    $region51: #{vit_forward.1} parent=1 // pred_check_branch
      %48 = sbr.rel (0) target = $region53
    $region52: #{vit_forward.1} parent=1 // pred_region
      _
    $region53: #{vit_forward.1} parent=1 // pred_fallthru
      _
    // Predicated region
    $region54: #{vit_forward.1} parent=1 // pred_check
      _
    $region55: #{vit_forward.1} parent=1 // pred_check_branch
      %50 = sbr.rel (0) target = $region57
    $region56: #{vit_forward.1} parent=1 // pred_region
      _
    $region57: #{vit_forward.1} parent=1 // pred_fallthru
      _
    // Predicated region
    $region58: #{vit_forward.1} parent=1 // pred_check
      _
    $region59: #{vit_forward.1} parent=1 // pred_check_branch
      %52 = sbr.rel (0) target = $region61
    $region60: #{vit_forward.1} parent=1 // pred_region
      _
    $region61: #{vit_forward.1} parent=1 // pred_fallthru
      _
    %v53 = vld [vmem:[%s0] sm:$0xff]
    %v54 = vld [vmem:[%s0 + $0x8] sm:$0xff]
    %v55 = vld [vmem:[%s0 + $0x10] sm:$0x3]
    %v56 = vld [vmem:[%s0 + $0x18] sm:$0x3]
    %v57 = vld [vmem:[%s1] ss:$2 sm:$0x3]
    %s58 = scalar_lea.vmem %s1, 1
    %v59 = vld [vmem:[%s58] ss:$2 sm:$0x3]
    %vm60 = vcmask 523264
    %v61 = vsel %vm60, %v54, 0.0
    %v62 = vadd.f32 %v53, %v61
    %63 = vadd.xlane.f32.xlu0 %v62
    %v64 = vpop.xlane.xlu0 %63
    %vm65 = vcmask 1041408
    %v66 = vsel %vm65, %v55, 0.0
    %vm67 = vcmask 517120
    %v68 = vsel %vm67, %v56, 0.0
    %v69 = vadd.f32 %v66, %v68
    %70 = vadd.xlane.f32.xlu0 %v69
    %v71 = vpop.xlane.xlu0 %70
    %v72 = vrcp.pop 192.0
    %v73 = vmul.f32 192.0, %v72
    %v74 = vsub.f32 1.0, %v73
    %v75 = vmul.f32 %v72, %v74
    %v76 = vadd.f32 %v72, %v75
    %vm77 = vweird.f32 %v72
    %v78 = vsel %vm77, %v72, %v76
    %v79 = vmul.f32 %v64, %v78
    %v80 = vmul.f32 %v71, %v78
    %v81 = vsub.f32 %v53, %v79
    %v82 = vsub.f32 %v54, %v79
    %v83 = vsub.f32 %v55, %v80
    %v84 = vsub.f32 %v56, %v80
    %v85 = vmul.f32 %v81, %v81
    %v86 = vmul.f32 %v82, %v82
    %v87 = vmul.f32 %v83, %v83
    %v88 = vmul.f32 %v84, %v84
    %v89 = vsel %vm60, %v86, 0.0
    %v90 = vadd.f32 %v85, %v89
    %91 = vadd.xlane.f32.xlu0 %v90
    %v92 = vpop.xlane.xlu0 %91
    %v93 = vsel %vm65, %v87, 0.0
    %v94 = vsel %vm67, %v88, 0.0
    %v95 = vadd.f32 %v93, %v94
    %96 = vadd.xlane.f32.xlu0 %v95
    %v97 = vpop.xlane.xlu0 %96
    %v98 = vmul.f32 %v92, %v78
    %v99 = vmul.f32 %v97, %v78
    %v100 = vadd.f32 %v98, 1e-05
    %v101 = vadd.f32 %v99, 1e-05
    %v102 = vrsqrt.pop %v100
    %v103 = vmul.f32 %v102, %v100
    %v104 = vmul.f32 %v103, %v102
    %v105 = vmul.f32 0.5, %v104
    %v106 = vsub.f32 1.5, %v105
    %v107 = vmul.f32 %v102, %v106
    %vm108 = vweird.f32 %v100
    %vm109 = vweird.f32 %v102
    %vm110 = vmor %vm108, %vm109
    %v111 = vsel %vm110, %v102, %v107
    %v112 = vrsqrt.pop %v101
    %v113 = vmul.f32 %v112, %v101
    %v114 = vmul.f32 %v113, %v112
    %v115 = vmul.f32 0.5, %v114
    %v116 = vsub.f32 1.5, %v115
    %v117 = vmul.f32 %v112, %v116
    %vm118 = vweird.f32 %v101
    %vm119 = vweird.f32 %v112
    %vm120 = vmor %vm118, %vm119
    %v121 = vsel %vm120, %v112, %v117
    %v122 = vmul.f32 %v81, %v111
    %v123 = vmul.f32 %v82, %v111
    %v124 = vmul.f32 %v83, %v121
    %v125 = vmul.f32 %v84, %v121
    %v127 = vperm.slane %v57, 0
    %v128 = vperm.slane %v57, 1
    %v131 = vmul.f32 %v122, %v127
    %v132 = vmul.f32 %v123, %v128
    %v133 = vmul.f32 %v124, %v127
    %v134 = vmul.f32 %v125, %v128
    %v136 = vperm.slane %v59, 0
    %v137 = vperm.slane %v59, 1
    %v140 = vadd.f32 %v131, %v136
    %v141 = vadd.f32 %v132, %v137
    %v142 = vadd.f32 %v133, %v136
    %v143 = vadd.f32 %v134, %v137
    %v144 = vld [vmem:[%s2] sm:$0xff]
    %v145 = vld [vmem:[%s2 + $0x8] sm:$0xff]
    %v146 = vld [vmem:[%s2 + $0x10] sm:$0xff]
    %v147 = vld [vmem:[%s2 + $0x18] sm:$0xff]
    %v148 = vld [vmem:[%s2 + $0x20] sm:$0xff]
    %v149 = vld [vmem:[%s2 + $0x28] sm:$0xff]
    %v150 = vld [vmem:[%s2 + $0x30] sm:$0xff]
    %v151 = vld [vmem:[%s2 + $0x38] sm:$0xff]
    %v152 = vld [vmem:[%s2 + $0x40] sm:$0xff]
    %v153 = vld [vmem:[%s2 + $0x48] sm:$0xff]
    %v154 = vld [vmem:[%s2 + $0x50] sm:$0xff]
    %v155 = vld [vmem:[%s2 + $0x58] sm:$0xff]
    %v156 = vld [vmem:[%s2 + $0x60] sm:$0xff]
    %v157 = vld [vmem:[%s2 + $0x68] sm:$0xff]
    %v158 = vld [vmem:[%s2 + $0x70] sm:$0xff]
    %v159 = vld [vmem:[%s2 + $0x78] sm:$0xff]
    %v160 = vld [vmem:[%s2 + $0x80] sm:$0xff]
    %v161 = vld [vmem:[%s2 + $0x88] sm:$0xff]
    %v162 = vld [vmem:[%s2 + $0x90] sm:$0xff]
    %v163 = vld [vmem:[%s2 + $0x98] sm:$0xff]
    %v164 = vld [vmem:[%s2 + $0xa0] sm:$0xff]
    %v165 = vld [vmem:[%s2 + $0xa8] sm:$0xff]
    %v166 = vld [vmem:[%s2 + $0xb0] sm:$0xff]
    %v167 = vld [vmem:[%s2 + $0xb8] sm:$0xff]
    %v168 = vld [vmem:[%s3] sm:$0x1]
    %v169 = vperm.slane %v168, 0
    %v171 = vsel %vm60, %v141, 0
    %v174 = vsel %vm60, %v143, 0
    %176 = vmatpush.msra.mxu0 %v159
    %177 = vmatpush.msra.mxu0 %v158
    %178 = vmatpush.msra.mxu0 %v157
    %179 = vmatpush.msra.mxu0 %v156
    %180 = vmatpush.msra.mxu0 %v155
    %181 = vmatpush.msra.mxu0 %v154
    %182 = vmatpush.msra.mxu0 %v153
    %183 = vmatpush.msra.mxu0 %v152
    %184 = vmatpush.msra.mxu0 %v151
    %185 = vmatpush.msra.mxu0 %v150
    %186 = vmatpush.msra.mxu0 %v149
    %187 = vmatpush.msra.mxu0 %v148
    %188 = vmatpush.msra.mxu0 %v147
    %189 = vmatpush.msra.mxu0 %v146
    %190 = vmatpush.msra.mxu0 %v145
    %191 = vmatpush.msra.mxu0 %v144
    %192 = vmatmul.f32.gmra.mxu0 %v140
    %v193 = vpop.f32.mrf.mxu0
    %v194 = vadd.f32 %v169, %v193
    %195 = vmatmul.f32.gmra.mxu0 %v142
    %v196 = vpop.f32.mrf.mxu0
    %v197 = vadd.f32 %v169, %v196
    %198 = vdwg.mxu0
    %199 = vmatpush.msra.mxu0 0.0
    %200 = vmatpush.msra.mxu0 0.0
    %201 = vmatpush.msra.mxu0 0.0
    %202 = vmatpush.msra.mxu0 0.0
    %203 = vmatpush.msra.mxu0 0.0
    %204 = vmatpush.msra.mxu0 0.0
    %205 = vmatpush.msra.mxu0 0.0
    %206 = vmatpush.msra.mxu0 0.0
    %207 = vmatpush.msra.mxu0 %v167
    %208 = vmatpush.msra.mxu0 %v166
    %209 = vmatpush.msra.mxu0 %v165
    %210 = vmatpush.msra.mxu0 %v164
    %211 = vmatpush.msra.mxu0 %v163
    %212 = vmatpush.msra.mxu0 %v162
    %213 = vmatpush.msra.mxu0 %v161
    %214 = vmatpush.msra.mxu0 %v160
    %215 = vmatmul.f32.gmra.mxu0 %v171
    %v216 = vpop.f32.mrf.mxu0
    %v217 = vadd.f32 %v194, %v216
    %218 = vmatmul.f32.gmra.mxu0 %v174
    %v219 = vpop.f32.mrf.mxu0
    %v220 = vadd.f32 %v197, %v219
    %221 = vdwg.mxu0
    %v222 = vld [vmem:[%s3 + $0x1] sm:$0x1]
    %v223 = vld [vmem:[%s3 + $0x2] sm:$0x1]
    %vm224 = vcmask 261120
    %v225 = vsel %vm224, %v217, 0.0
    %226 = vadd.xlane.f32.xlu0 %v225
    %v227 = vpop.xlane.xlu0 %226
    %vm228 = vcmask 254976
    %v229 = vsel %vm228, %v220, 0.0
    %230 = vadd.xlane.f32.xlu0 %v229
    %v231 = vpop.xlane.xlu0 %230
    %v232 = vrcp.pop 32.0
    %v233 = vmul.f32 32.0, %v232
    %v234 = vsub.f32 1.0, %v233
    %v235 = vmul.f32 %v232, %v234
    %v236 = vadd.f32 %v232, %v235
    %vm237 = vweird.f32 %v232
    %v238 = vsel %vm237, %v232, %v236
    %v239 = vmul.f32 %v227, %v238
    %v240 = vmul.f32 %v231, %v238
    %v241 = vsub.f32 %v217, %v239
    %v242 = vsub.f32 %v220, %v240
    %v243 = vmul.f32 %v241, %v241
    %v244 = vmul.f32 %v242, %v242
    %v245 = vsel %vm224, %v243, 0.0
    %246 = vadd.xlane.f32.xlu0 %v245
    %v247 = vpop.xlane.xlu0 %246
    %v248 = vsel %vm228, %v244, 0.0
    %249 = vadd.xlane.f32.xlu0 %v248
    %v250 = vpop.xlane.xlu0 %249
    %v251 = vmul.f32 %v247, %v238
    %v252 = vmul.f32 %v250, %v238
    %v253 = vadd.f32 %v251, 1e-05
    %v254 = vadd.f32 %v252, 1e-05
    %v255 = vrsqrt.pop %v253
    %v256 = vmul.f32 %v255, %v253
    %v257 = vmul.f32 %v256, %v255
    %v258 = vmul.f32 0.5, %v257
    %v259 = vsub.f32 1.5, %v258
    %v260 = vmul.f32 %v255, %v259
    %vm261 = vweird.f32 %v253
    %vm262 = vweird.f32 %v255
    %vm263 = vmor %vm261, %vm262
    %v264 = vsel %vm263, %v255, %v260
    %v265 = vrsqrt.pop %v254
    %v266 = vmul.f32 %v265, %v254
    %v267 = vmul.f32 %v266, %v265
    %v268 = vmul.f32 0.5, %v267
    %v269 = vsub.f32 1.5, %v268
    %v270 = vmul.f32 %v265, %v269
    %vm271 = vweird.f32 %v254
    %vm272 = vweird.f32 %v265
    %vm273 = vmor %vm271, %vm272
    %v274 = vsel %vm273, %v265, %v270
    %v275 = vmul.f32 %v241, %v264
    %v276 = vmul.f32 %v242, %v274
    %v277 = vperm.slane %v222, 0
    %v278 = vmul.f32 %v275, %v277
    %v279 = vmul.f32 %v276, %v277
    %v280 = vperm.slane %v223, 0
    %v281 = vadd.f32 %v278, %v280
    %v282 = vadd.f32 %v279, %v280
    %v283 = vld [vmem:[%s4] sm:$0xff]
    %v284 = vld [vmem:[%s4 + $0x8] sm:$0x3]
    %v285 = vmul.f32 %v281, %v283
    %v286 = vmul.f32 %v282, %v284
    %v287 = vld [vmem:[%s5] sm:$0xff]
    %v288 = vld [vmem:[%s5 + $0x8] sm:$0x3]
    %v289 = vadd.f32 %v285, %v287
    %v290 = vadd.f32 %v286, %v288
    %v291 = vld [vmem:[%s6] sm:$0xff]
    %v292 = vld [vmem:[%s6 + $0x8] sm:$0x3]
    %v293 = vld [vmem:[%s8] sm:$0x3f]
    %v294 = vsel %vm224, %v289, 0.0
    %295 = vadd.xlane.f32.xlu0 %v294
    %v296 = vpop.xlane.xlu0 %295
    %v297 = vsel %vm228, %v290, 0.0
    %298 = vadd.xlane.f32.xlu0 %v297
    %v299 = vpop.xlane.xlu0 %298
    %v300 = vmul.f32 %v296, %v238
    %v301 = vmul.f32 %v299, %v238
    %v302 = vsub.f32 %v289, %v300
    %v303 = vsub.f32 %v290, %v301
    %v304 = vmul.f32 %v302, %v302
    %v305 = vmul.f32 %v303, %v303
    %v306 = vsel %vm224, %v304, 0.0
    %307 = vadd.xlane.f32.xlu0 %v306
    %v308 = vpop.xlane.xlu0 %307
    %v309 = vsel %vm228, %v305, 0.0
    %310 = vadd.xlane.f32.xlu0 %v309
    %v311 = vpop.xlane.xlu0 %310
    %v312 = vmul.f32 %v308, %v238
    %v313 = vmul.f32 %v311, %v238
    %v314 = vadd.f32 %v312, 1e-05
    %v315 = vadd.f32 %v313, 1e-05
    %v316 = vrsqrt.pop %v314
    %v317 = vmul.f32 %v316, %v314
    %v318 = vmul.f32 %v317, %v316
    %v319 = vmul.f32 0.5, %v318
    %v320 = vsub.f32 1.5, %v319
    %v321 = vmul.f32 %v316, %v320
    %vm322 = vweird.f32 %v314
    %vm323 = vweird.f32 %v316
    %vm324 = vmor %vm322, %vm323
    %v325 = vsel %vm324, %v316, %v321
    %v326 = vrsqrt.pop %v315
    %v327 = vmul.f32 %v326, %v315
    %v328 = vmul.f32 %v327, %v326
    %v329 = vmul.f32 0.5, %v328
    %v330 = vsub.f32 1.5, %v329
    %v331 = vmul.f32 %v326, %v330
    %vm332 = vweird.f32 %v315
    %vm333 = vweird.f32 %v326
    %vm334 = vmor %vm332, %vm333
    %v335 = vsel %vm334, %v326, %v331
    %v336 = vmul.f32 %v302, %v325
    %v337 = vmul.f32 %v303, %v335
    %v338 = vperm.slane %v293, 0
    %v339 = vmul.f32 %v336, %v338
    %v340 = vmul.f32 %v337, %v338
    %v341 = vperm.slane %v293, 1
    %v342 = vadd.f32 %v339, %v341
    %v343 = vadd.f32 %v340, %v341
    %v344 = vld [vmem:[%s9] sm:$0xff]
    %v345 = vld [vmem:[%s9 + $0x8] sm:$0xff]
    %v346 = vld [vmem:[%s9 + $0x10] sm:$0xff]
    %v347 = vld [vmem:[%s9 + $0x18] sm:$0xff]
    %v349 = vsel %vm224, %v342, 0
    %v352 = vsel %vm224, %v343, 0
    %354 = vmatpush.msra.mxu0 0.0
    %355 = vmatpush.msra.mxu0 0.0
    %356 = vmatpush.msra.mxu0 0.0
    %357 = vmatpush.msra.mxu0 0.0
    %358 = vmatpush.msra.mxu0 0.0
    %359 = vmatpush.msra.mxu0 0.0
    %360 = vmatpush.msra.mxu0 0.0
    %361 = vmatpush.msra.mxu0 0.0
    %362 = vmatpush.msra.mxu0 0.0
    %363 = vmatpush.msra.mxu0 0.0
    %364 = vmatpush.msra.mxu0 0.0
    %365 = vmatpush.msra.mxu0 0.0
    %366 = vmatpush.msra.mxu0 %v347
    %367 = vmatpush.msra.mxu0 %v346
    %368 = vmatpush.msra.mxu0 %v345
    %369 = vmatpush.msra.mxu0 %v344
    %370 = vmatmul.f32.gmra.mxu0 %v349
    %v371 = vpop.f32.mrf.mxu0
    %v372 = vadd.f32 0.0, %v371
    %373 = vmatmul.f32.gmra.mxu0 %v352
    %v374 = vpop.f32.mrf.mxu0
    %v375 = vadd.f32 0.0, %v374
    %376 = vdwg.mxu0
    %379 = vrot.lane.b32.xlu0 %v372, 96
    %v380 = vpop.permute.xlu0 %379
    %381 = vrot.lane.b32.xlu0 %v375, 96
    %v382 = vpop.permute.xlu0 %381
    %vm383 = vcmask 64512
    %v384 = vsel %vm383, %v372, 0
    %v386 = vsel %vm383, %v375, 0
    %v388 = vsel %vm383, %v380, 0
    %v390 = vsel %vm383, %v382, 0
    %392 = vmatpush.xpose.msra.mxu0 0.0
    %393 = vmatpush.xpose.msra.mxu0 0.0
    %394 = vmatpush.xpose.msra.mxu0 0.0
    %395 = vmatpush.xpose.msra.mxu0 0.0
    %396 = vmatpush.xpose.msra.mxu0 0.0
    %397 = vmatpush.xpose.msra.mxu0 0.0
    %398 = vmatpush.xpose.msra.mxu0 0.0
    %399 = vmatpush.xpose.msra.mxu0 0.0
    %400 = vmatpush.xpose.msra.mxu0 0.0
    %401 = vmatpush.xpose.msra.mxu0 0.0
    %402 = vmatpush.xpose.msra.mxu0 0.0
    %403 = vmatpush.xpose.msra.mxu0 0.0
    %404 = vmatpush.xpose.msra.mxu0 0.0
    %405 = vmatpush.xpose.msra.mxu0 0.0
    %406 = vmatpush.xpose.msra.mxu0 %v390
    %407 = vmatpush.xpose.msra.mxu0 %v388
    %408 = vmatmul.f32.gmra.mxu0 %v384
    %v409 = vpop.f32.mrf.mxu0
    %v410 = vadd.f32 0.0, %v409
    %411 = vmatmul.f32.gmra.mxu0 %v386
    %v412 = vpop.f32.mrf.mxu0
    %v413 = vadd.f32 0.0, %v412
    %414 = vdwg.mxu0
    %v415 = vmul.f32 %v410, 0.35355338
    %v416 = vmul.f32 %v413, 0.35355338
    %v417 = vadd.f32 %v415, %v291
    %v418 = vadd.f32 %v416, %v292
    %vm419 = vcmask 80896
    %v420 = vsel %vm419, %v417, -inf
    %421 = vmax.xlane.f32.xlu0 %v420
    %v422 = vpop.xlane.xlu0 %421
    %vm423 = vcmask 74752
    %v424 = vsel %vm423, %v418, -inf
    %425 = vmax.xlane.f32.xlu0 %v424
    %v426 = vpop.xlane.xlu0 %425
    %v427 = vsub.f32 %v417, %v422
    %v428 = vsub.f32 %v418, %v426
    %v429 = vmul.f32 %v427, 1.442695
    %v430 = vpow.pop %v429
    %v431 = vmul.f32 %v428, 1.442695
    %v432 = vpow.pop %v431
    %v433 = vsel %vm419, %v430, 0.0
    %434 = vadd.xlane.f32.xlu0 %v433
    %v435 = vpop.xlane.xlu0 %434
    %v436 = vsel %vm423, %v432, 0.0
    %437 = vadd.xlane.f32.xlu0 %v436
    %v438 = vpop.xlane.xlu0 %437
    %v439 = vrcp.pop %v435
    %v440 = vmul.f32 %v435, %v439
    %v441 = vsub.f32 1.0, %v440
    %v442 = vmul.f32 %v439, %v441
    %v443 = vadd.f32 %v439, %v442
    %vm444 = vweird.f32 %v435
    %vm445 = vweird.f32 %v439
    %vm446 = vmor %vm444, %vm445
    %v447 = vsel %vm446, %v439, %v443
    %v448 = vand.u32 2147483647, %v435
    %vm449 = vcmp.eq.f32.partialorder %v448, 8.507059e+37
    %v450 = vand.u32 %v435, 2147483648
    %v451 = vor.u32 1.1754944e-38, %v450
    %v452 = vsel %vm449, %v451, %v447
    %v453 = vmul.f32 %v430, %v452
    %v454 = vrcp.pop %v438
    %v455 = vmul.f32 %v438, %v454
    %v456 = vsub.f32 1.0, %v455
    %v457 = vmul.f32 %v454, %v456
    %v458 = vadd.f32 %v454, %v457
    %vm459 = vweird.f32 %v438
    %vm460 = vweird.f32 %v454
    %vm461 = vmor %vm459, %vm460
    %v462 = vsel %vm461, %v454, %v458
    %v463 = vand.u32 2147483647, %v438
    %vm464 = vcmp.eq.f32.partialorder %v463, 8.507059e+37
    %v465 = vand.u32 %v438, 2147483648
    %v466 = vor.u32 1.1754944e-38, %v465
    %v467 = vsel %vm464, %v466, %v462
    %v468 = vmul.f32 %v432, %v467
    %469 = vrot.lane.b32.xlu0 %v372, 64
    %v470 = vpop.permute.xlu0 %469
    %471 = vrot.lane.b32.xlu0 %v375, 64
    %v472 = vpop.permute.xlu0 %471
    %v475 = vsel %vm419, %v453, 0
    %v478 = vsel %vm419, %v468, 0
    %v480 = vsel %vm65, %v472, 0
    %482 = vmatpush.msra.mxu0 0.0
    %483 = vmatpush.msra.mxu0 0.0
    %484 = vmatpush.msra.mxu0 0.0
    %485 = vmatpush.msra.mxu0 0.0
    %486 = vmatpush.msra.mxu0 0.0
    %487 = vmatpush.msra.mxu0 0.0
    %488 = vmatpush.msra.mxu0 0.0
    %489 = vmatpush.msra.mxu0 0.0
    %490 = vmatpush.msra.mxu0 0.0
    %491 = vmatpush.msra.mxu0 0.0
    %492 = vmatpush.msra.mxu0 0.0
    %493 = vmatpush.msra.mxu0 0.0
    %494 = vmatpush.msra.mxu0 0.0
    %495 = vmatpush.msra.mxu0 0.0
    %496 = vmatpush.msra.mxu0 %v480
    %497 = vmatpush.msra.mxu0 %v470
    %498 = vmatmul.f32.gmra.mxu0 %v475
    %v499 = vpop.f32.mrf.mxu0
    %v500 = vadd.f32 0.0, %v499
    %501 = vmatmul.f32.gmra.mxu0 %v478
    %v502 = vpop.f32.mrf.mxu0
    %v503 = vadd.f32 0.0, %v502
    %504 = vdwg.mxu0
    %505 = vrot.lane.b32.xlu0 %v372, 120
    %v506 = vpop.permute.xlu0 %505
    %507 = vrot.lane.b32.xlu0 %v375, 120
    %v508 = vpop.permute.xlu0 %507
    %509 = vrot.lane.b32.xlu0 %v372, 88
    %v510 = vpop.permute.xlu0 %509
    %511 = vrot.lane.b32.xlu0 %v375, 88
    %v512 = vpop.permute.xlu0 %511
    %v513 = vsel %vm383, %v506, 0
    %v515 = vsel %vm383, %v508, 0
    %v517 = vsel %vm383, %v510, 0
    %v519 = vsel %vm383, %v512, 0
    %521 = vmatpush.xpose.msra.mxu0 0.0
    %522 = vmatpush.xpose.msra.mxu0 0.0
    %523 = vmatpush.xpose.msra.mxu0 0.0
    %524 = vmatpush.xpose.msra.mxu0 0.0
    %525 = vmatpush.xpose.msra.mxu0 0.0
    %526 = vmatpush.xpose.msra.mxu0 0.0
    %527 = vmatpush.xpose.msra.mxu0 0.0
    %528 = vmatpush.xpose.msra.mxu0 0.0
    %529 = vmatpush.xpose.msra.mxu0 0.0
    %530 = vmatpush.xpose.msra.mxu0 0.0
    %531 = vmatpush.xpose.msra.mxu0 0.0
    %532 = vmatpush.xpose.msra.mxu0 0.0
    %533 = vmatpush.xpose.msra.mxu0 0.0
    %534 = vmatpush.xpose.msra.mxu0 0.0
    %535 = vmatpush.xpose.msra.mxu0 %v519
    %536 = vmatpush.xpose.msra.mxu0 %v517
    %537 = vmatmul.f32.gmra.mxu0 %v513
    %v538 = vpop.f32.mrf.mxu0
    %v539 = vadd.f32 0.0, %v538
    %540 = vmatmul.f32.gmra.mxu0 %v515
    %v541 = vpop.f32.mrf.mxu0
    %v542 = vadd.f32 0.0, %v541
    %543 = vdwg.mxu0
    %v544 = vmul.f32 %v539, 0.35355338
    %v545 = vmul.f32 %v542, 0.35355338
    %v546 = vadd.f32 %v544, %v291
    %v547 = vadd.f32 %v545, %v292
    %v548 = vsel %vm419, %v546, -inf
    %549 = vmax.xlane.f32.xlu0 %v548
    %v550 = vpop.xlane.xlu0 %549
    %v551 = vsel %vm423, %v547, -inf
    %552 = vmax.xlane.f32.xlu0 %v551
    %v553 = vpop.xlane.xlu0 %552
    %v554 = vsub.f32 %v546, %v550
    %v555 = vsub.f32 %v547, %v553
    %v556 = vmul.f32 %v554, 1.442695
    %v557 = vpow.pop %v556
    %v558 = vmul.f32 %v555, 1.442695
    %v559 = vpow.pop %v558
    %v560 = vsel %vm419, %v557, 0.0
    %561 = vadd.xlane.f32.xlu0 %v560
    %v562 = vpop.xlane.xlu0 %561
    %v563 = vsel %vm423, %v559, 0.0
    %564 = vadd.xlane.f32.xlu0 %v563
    %v565 = vpop.xlane.xlu0 %564
    %v566 = vrcp.pop %v562
    %v567 = vmul.f32 %v562, %v566
    %v568 = vsub.f32 1.0, %v567
    %v569 = vmul.f32 %v566, %v568
    %v570 = vadd.f32 %v566, %v569
    %vm571 = vweird.f32 %v562
    %vm572 = vweird.f32 %v566
    %vm573 = vmor %vm571, %vm572
    %v574 = vsel %vm573, %v566, %v570
    %v575 = vand.u32 2147483647, %v562
    %vm576 = vcmp.eq.f32.partialorder %v575, 8.507059e+37
    %v577 = vand.u32 %v562, 2147483648
    %v578 = vor.u32 1.1754944e-38, %v577
    %v579 = vsel %vm576, %v578, %v574
    %v580 = vmul.f32 %v557, %v579
    %v581 = vrcp.pop %v565
    %v582 = vmul.f32 %v565, %v581
    %v583 = vsub.f32 1.0, %v582
    %v584 = vmul.f32 %v581, %v583
    %v585 = vadd.f32 %v581, %v584
    %vm586 = vweird.f32 %v565
    %vm587 = vweird.f32 %v581
    %vm588 = vmor %vm586, %vm587
    %v589 = vsel %vm588, %v581, %v585
    %v590 = vand.u32 2147483647, %v565
    %vm591 = vcmp.eq.f32.partialorder %v590, 8.507059e+37
    %v592 = vand.u32 %v565, 2147483648
    %v593 = vor.u32 1.1754944e-38, %v592
    %v594 = vsel %vm591, %v593, %v589
    %v595 = vmul.f32 %v559, %v594
    %596 = vrot.lane.b32.xlu0 %v372, 56
    %v597 = vpop.permute.xlu0 %596
    %598 = vrot.lane.b32.xlu0 %v375, 56
    %v599 = vpop.permute.xlu0 %598
    %v602 = vsel %vm419, %v580, 0
    %v605 = vsel %vm419, %v595, 0
    %v607 = vsel %vm65, %v599, 0
    %609 = vmatpush.msra.mxu0 0.0
    %610 = vmatpush.msra.mxu0 0.0
    %611 = vmatpush.msra.mxu0 0.0
    %612 = vmatpush.msra.mxu0 0.0
    %613 = vmatpush.msra.mxu0 0.0
    %614 = vmatpush.msra.mxu0 0.0
    %615 = vmatpush.msra.mxu0 0.0
    %616 = vmatpush.msra.mxu0 0.0
    %617 = vmatpush.msra.mxu0 0.0
    %618 = vmatpush.msra.mxu0 0.0
    %619 = vmatpush.msra.mxu0 0.0
    %620 = vmatpush.msra.mxu0 0.0
    %621 = vmatpush.msra.mxu0 0.0
    %622 = vmatpush.msra.mxu0 0.0
    %623 = vmatpush.msra.mxu0 %v607
    %624 = vmatpush.msra.mxu0 %v597
    %625 = vmatmul.f32.gmra.mxu0 %v602
    %v626 = vpop.f32.mrf.mxu0
    %v627 = vadd.f32 0.0, %v626
    %628 = vmatmul.f32.gmra.mxu0 %v605
    %v629 = vpop.f32.mrf.mxu0
    %v630 = vadd.f32 0.0, %v629
    %631 = vdwg.mxu0
    %632 = vrot.lane.b32.xlu0 %v372, 112
    %v633 = vpop.permute.xlu0 %632
    %634 = vrot.lane.b32.xlu0 %v375, 112
    %v635 = vpop.permute.xlu0 %634
    %636 = vrot.lane.b32.xlu0 %v372, 80
    %v637 = vpop.permute.xlu0 %636
    %638 = vrot.lane.b32.xlu0 %v375, 80
    %v639 = vpop.permute.xlu0 %638
    %v640 = vsel %vm383, %v633, 0
    %v642 = vsel %vm383, %v635, 0
    %v644 = vsel %vm383, %v637, 0
    %v646 = vsel %vm383, %v639, 0
    %648 = vmatpush.xpose.msra.mxu0 0.0
    %649 = vmatpush.xpose.msra.mxu0 0.0
    %650 = vmatpush.xpose.msra.mxu0 0.0
    %651 = vmatpush.xpose.msra.mxu0 0.0
    %652 = vmatpush.xpose.msra.mxu0 0.0
    %653 = vmatpush.xpose.msra.mxu0 0.0
    %654 = vmatpush.xpose.msra.mxu0 0.0
    %655 = vmatpush.xpose.msra.mxu0 0.0
    %656 = vmatpush.xpose.msra.mxu0 0.0
    %657 = vmatpush.xpose.msra.mxu0 0.0
    %658 = vmatpush.xpose.msra.mxu0 0.0
    %659 = vmatpush.xpose.msra.mxu0 0.0
    %660 = vmatpush.xpose.msra.mxu0 0.0
    %661 = vmatpush.xpose.msra.mxu0 0.0
    %662 = vmatpush.xpose.msra.mxu0 %v646
    %663 = vmatpush.xpose.msra.mxu0 %v644
    %664 = vmatmul.f32.gmra.mxu0 %v640
    %v665 = vpop.f32.mrf.mxu0
    %v666 = vadd.f32 0.0, %v665
    %667 = vmatmul.f32.gmra.mxu0 %v642
    %v668 = vpop.f32.mrf.mxu0
    %v669 = vadd.f32 0.0, %v668
    %670 = vdwg.mxu0
    %v671 = vmul.f32 %v666, 0.35355338
    %v672 = vmul.f32 %v669, 0.35355338
    %v673 = vadd.f32 %v671, %v291
    %v674 = vadd.f32 %v672, %v292
    %v675 = vsel %vm419, %v673, -inf
    %676 = vmax.xlane.f32.xlu0 %v675
    %v677 = vpop.xlane.xlu0 %676
    %v678 = vsel %vm423, %v674, -inf
    %679 = vmax.xlane.f32.xlu0 %v678
    %v680 = vpop.xlane.xlu0 %679
    %v681 = vsub.f32 %v673, %v677
    %v682 = vsub.f32 %v674, %v680
    %v683 = vmul.f32 %v681, 1.442695
    %v684 = vpow.pop %v683
    %v685 = vmul.f32 %v682, 1.442695
    %v686 = vpow.pop %v685
    %v687 = vsel %vm419, %v684, 0.0
    %688 = vadd.xlane.f32.xlu0 %v687
    %v689 = vpop.xlane.xlu0 %688
    %v690 = vsel %vm423, %v686, 0.0
    %691 = vadd.xlane.f32.xlu0 %v690
    %v692 = vpop.xlane.xlu0 %691
    %v693 = vrcp.pop %v689
    %v694 = vmul.f32 %v689, %v693
    %v695 = vsub.f32 1.0, %v694
    %v696 = vmul.f32 %v693, %v695
    %v697 = vadd.f32 %v693, %v696
    %vm698 = vweird.f32 %v689
    %vm699 = vweird.f32 %v693
    %vm700 = vmor %vm698, %vm699
    %v701 = vsel %vm700, %v693, %v697
    %v702 = vand.u32 2147483647, %v689
    %vm703 = vcmp.eq.f32.partialorder %v702, 8.507059e+37
    %v704 = vand.u32 %v689, 2147483648
    %v705 = vor.u32 1.1754944e-38, %v704
    %v706 = vsel %vm703, %v705, %v701
    %v707 = vmul.f32 %v684, %v706
    %v708 = vrcp.pop %v692
    %v709 = vmul.f32 %v692, %v708
    %v710 = vsub.f32 1.0, %v709
    %v711 = vmul.f32 %v708, %v710
    %v712 = vadd.f32 %v708, %v711
    %vm713 = vweird.f32 %v692
    %vm714 = vweird.f32 %v708
    %vm715 = vmor %vm713, %vm714
    %v716 = vsel %vm715, %v708, %v712
    %v717 = vand.u32 2147483647, %v692
    %vm718 = vcmp.eq.f32.partialorder %v717, 8.507059e+37
    %v719 = vand.u32 %v692, 2147483648
    %v720 = vor.u32 1.1754944e-38, %v719
    %v721 = vsel %vm718, %v720, %v716
    %v722 = vmul.f32 %v686, %v721
    %723 = vrot.lane.b32.xlu0 %v372, 48
    %v724 = vpop.permute.xlu0 %723
    %725 = vrot.lane.b32.xlu0 %v375, 48
    %v726 = vpop.permute.xlu0 %725
    %v729 = vsel %vm419, %v707, 0
    %v732 = vsel %vm419, %v722, 0
    %v734 = vsel %vm65, %v726, 0
    %736 = vmatpush.msra.mxu0 0.0
    %737 = vmatpush.msra.mxu0 0.0
    %738 = vmatpush.msra.mxu0 0.0
    %739 = vmatpush.msra.mxu0 0.0
    %740 = vmatpush.msra.mxu0 0.0
    %741 = vmatpush.msra.mxu0 0.0
    %742 = vmatpush.msra.mxu0 0.0
    %743 = vmatpush.msra.mxu0 0.0
    %744 = vmatpush.msra.mxu0 0.0
    %745 = vmatpush.msra.mxu0 0.0
    %746 = vmatpush.msra.mxu0 0.0
    %747 = vmatpush.msra.mxu0 0.0
    %748 = vmatpush.msra.mxu0 0.0
    %749 = vmatpush.msra.mxu0 0.0
    %750 = vmatpush.msra.mxu0 %v734
    %751 = vmatpush.msra.mxu0 %v724
    %752 = vmatmul.f32.gmra.mxu0 %v729
    %v753 = vpop.f32.mrf.mxu0
    %v754 = vadd.f32 0.0, %v753
    %755 = vmatmul.f32.gmra.mxu0 %v732
    %v756 = vpop.f32.mrf.mxu0
    %v757 = vadd.f32 0.0, %v756
    %758 = vdwg.mxu0
    %759 = vrot.lane.b32.xlu0 %v372, 104
    %v760 = vpop.permute.xlu0 %759
    %761 = vrot.lane.b32.xlu0 %v375, 104
    %v762 = vpop.permute.xlu0 %761
    %763 = vrot.lane.b32.xlu0 %v372, 72
    %v764 = vpop.permute.xlu0 %763
    %765 = vrot.lane.b32.xlu0 %v375, 72
    %v766 = vpop.permute.xlu0 %765
    %v767 = vsel %vm383, %v760, 0
    %v769 = vsel %vm383, %v762, 0
    %v771 = vsel %vm383, %v764, 0
    %v773 = vsel %vm383, %v766, 0
    %775 = vmatpush.xpose.msra.mxu0 0.0
    %776 = vmatpush.xpose.msra.mxu0 0.0
    %777 = vmatpush.xpose.msra.mxu0 0.0
    %778 = vmatpush.xpose.msra.mxu0 0.0
    %779 = vmatpush.xpose.msra.mxu0 0.0
    %780 = vmatpush.xpose.msra.mxu0 0.0
    %781 = vmatpush.xpose.msra.mxu0 0.0
    %782 = vmatpush.xpose.msra.mxu0 0.0
    %783 = vmatpush.xpose.msra.mxu0 0.0
    %784 = vmatpush.xpose.msra.mxu0 0.0
    %785 = vmatpush.xpose.msra.mxu0 0.0
    %786 = vmatpush.xpose.msra.mxu0 0.0
    %787 = vmatpush.xpose.msra.mxu0 0.0
    %788 = vmatpush.xpose.msra.mxu0 0.0
    %789 = vmatpush.xpose.msra.mxu0 %v773
    %790 = vmatpush.xpose.msra.mxu0 %v771
    %791 = vmatmul.f32.gmra.mxu0 %v767
    %v792 = vpop.f32.mrf.mxu0
    %v793 = vadd.f32 0.0, %v792
    %794 = vmatmul.f32.gmra.mxu0 %v769
    %v795 = vpop.f32.mrf.mxu0
    %v796 = vadd.f32 0.0, %v795
    %797 = vdwg.mxu0
    %v798 = vmul.f32 %v793, 0.35355338
    %v799 = vmul.f32 %v796, 0.35355338
    %v800 = vadd.f32 %v798, %v291
    %v801 = vadd.f32 %v799, %v292
    %v802 = vsel %vm419, %v800, -inf
    %803 = vmax.xlane.f32.xlu0 %v802
    %v804 = vpop.xlane.xlu0 %803
    %v805 = vsel %vm423, %v801, -inf
    %806 = vmax.xlane.f32.xlu0 %v805
    %v807 = vpop.xlane.xlu0 %806
    %v808 = vsub.f32 %v800, %v804
    %v809 = vsub.f32 %v801, %v807
    %v810 = vmul.f32 %v808, 1.442695
    %v811 = vpow.pop %v810
    %v812 = vmul.f32 %v809, 1.442695
    %v813 = vpow.pop %v812
    %v814 = vsel %vm419, %v811, 0.0
    %815 = vadd.xlane.f32.xlu0 %v814
    %v816 = vpop.xlane.xlu0 %815
    %v817 = vsel %vm423, %v813, 0.0
    %818 = vadd.xlane.f32.xlu0 %v817
    %v819 = vpop.xlane.xlu0 %818
    %v820 = vrcp.pop %v816
    %v821 = vmul.f32 %v816, %v820
    %v822 = vsub.f32 1.0, %v821
    %v823 = vmul.f32 %v820, %v822
    %v824 = vadd.f32 %v820, %v823
    %vm825 = vweird.f32 %v816
    %vm826 = vweird.f32 %v820
    %vm827 = vmor %vm825, %vm826
    %v828 = vsel %vm827, %v820, %v824
    %v829 = vand.u32 2147483647, %v816
    %vm830 = vcmp.eq.f32.partialorder %v829, 8.507059e+37
    %v831 = vand.u32 %v816, 2147483648
    %v832 = vor.u32 1.1754944e-38, %v831
    %v833 = vsel %vm830, %v832, %v828
    %v834 = vmul.f32 %v811, %v833
    %v835 = vrcp.pop %v819
    %v836 = vmul.f32 %v819, %v835
    %v837 = vsub.f32 1.0, %v836
    %v838 = vmul.f32 %v835, %v837
    %v839 = vadd.f32 %v835, %v838
    %vm840 = vweird.f32 %v819
    %vm841 = vweird.f32 %v835
    %vm842 = vmor %vm840, %vm841
    %v843 = vsel %vm842, %v835, %v839
    %v844 = vand.u32 2147483647, %v819
    %vm845 = vcmp.eq.f32.partialorder %v844, 8.507059e+37
    %v846 = vand.u32 %v819, 2147483648
    %v847 = vor.u32 1.1754944e-38, %v846
    %v848 = vsel %vm845, %v847, %v843
    %v849 = vmul.f32 %v813, %v848
    %850 = vrot.lane.b32.xlu0 %v372, 40
    %v851 = vpop.permute.xlu0 %850
    %852 = vrot.lane.b32.xlu0 %v375, 40
    %v853 = vpop.permute.xlu0 %852
    %v856 = vsel %vm419, %v834, 0
    %v859 = vsel %vm419, %v849, 0
    %v861 = vsel %vm65, %v853, 0
    %863 = vmatpush.msra.mxu0 0.0
    %864 = vmatpush.msra.mxu0 0.0
    %865 = vmatpush.msra.mxu0 0.0
    %866 = vmatpush.msra.mxu0 0.0
    %867 = vmatpush.msra.mxu0 0.0
    %868 = vmatpush.msra.mxu0 0.0
    %869 = vmatpush.msra.mxu0 0.0
    %870 = vmatpush.msra.mxu0 0.0
    %871 = vmatpush.msra.mxu0 0.0
    %872 = vmatpush.msra.mxu0 0.0
    %873 = vmatpush.msra.mxu0 0.0
    %874 = vmatpush.msra.mxu0 0.0
    %875 = vmatpush.msra.mxu0 0.0
    %876 = vmatpush.msra.mxu0 0.0
    %877 = vmatpush.msra.mxu0 %v861
    %878 = vmatpush.msra.mxu0 %v851
    %879 = vmatmul.f32.gmra.mxu0 %v856
    %v880 = vpop.f32.mrf.mxu0
    %v881 = vadd.f32 0.0, %v880
    %882 = vmatmul.f32.gmra.mxu0 %v859
    %v883 = vpop.f32.mrf.mxu0
    %v884 = vadd.f32 0.0, %v883
    %885 = vdwg.mxu0
    %888 = vrot.lane.b32.xlu0 %v627, 8
    %v889 = vpop.permute.xlu0 %888
    %890 = vrot.lane.b32.xlu0 %v630, 8
    %v891 = vpop.permute.xlu0 %890
    %896 = vrot.lane.b32.xlu0 %v754, 16
    %v897 = vpop.permute.xlu0 %896
    %898 = vrot.lane.b32.xlu0 %v757, 16
    %v899 = vpop.permute.xlu0 %898
    %904 = vrot.lane.b32.xlu0 %v881, 24
    %v905 = vpop.permute.xlu0 %904
    %906 = vrot.lane.b32.xlu0 %v884, 24
    %v907 = vpop.permute.xlu0 %906
    %v910 = vsel %vm383, %v500, %v889
    %v911 = vsel %vm383, %v503, %v891
    %vm912 = vcmask 130048
    %v913 = vsel %vm912, %v910, %v897
    %v914 = vsel %vm912, %v911, %v899
    %vm915 = vcmask 195584
    %v916 = vsel %vm915, %v913, %v905
    %v917 = vsel %vm915, %v914, %v907
    %v918 = vld [vmem:[%s10] sm:$0xff]
    %v919 = vld [vmem:[%s10 + $0x8] sm:$0xff]
    %v920 = vld [vmem:[%s10 + $0x10] sm:$0xff]
    %v921 = vld [vmem:[%s10 + $0x18] sm:$0xff]
    %v923 = vsel %vm224, %v916, 0
    %v926 = vsel %vm224, %v917, 0
    %928 = vmatpush.msra.mxu0 0.0
    %929 = vmatpush.msra.mxu0 0.0
    %930 = vmatpush.msra.mxu0 0.0
    %931 = vmatpush.msra.mxu0 0.0
    %932 = vmatpush.msra.mxu0 0.0
    %933 = vmatpush.msra.mxu0 0.0
    %934 = vmatpush.msra.mxu0 0.0
    %935 = vmatpush.msra.mxu0 0.0
    %936 = vmatpush.msra.mxu0 0.0
    %937 = vmatpush.msra.mxu0 0.0
    %938 = vmatpush.msra.mxu0 0.0
    %939 = vmatpush.msra.mxu0 0.0
    %940 = vmatpush.msra.mxu0 %v921
    %941 = vmatpush.msra.mxu0 %v920
    %942 = vmatpush.msra.mxu0 %v919
    %943 = vmatpush.msra.mxu0 %v918
    %944 = vmatmul.f32.gmra.mxu0 %v923
    %v945 = vpop.f32.mrf.mxu0
    %v946 = vadd.f32 0.0, %v945
    %947 = vmatmul.f32.gmra.mxu0 %v926
    %v948 = vpop.f32.mrf.mxu0
    %v949 = vadd.f32 0.0, %v948
    %950 = vdwg.mxu0
    %v951 = vadd.f32 %v289, %v946
    %v952 = vadd.f32 %v290, %v949
    %v953 = vperm.slane %v293, 2
    %v954 = vadd.f32 %v951, %v953
    %v955 = vadd.f32 %v952, %v953
    %v956 = vsel %vm224, %v954, 0.0
    %957 = vadd.xlane.f32.xlu0 %v956
    %v958 = vpop.xlane.xlu0 %957
    %v959 = vsel %vm228, %v955, 0.0
    %960 = vadd.xlane.f32.xlu0 %v959
    %v961 = vpop.xlane.xlu0 %960
    %v962 = vmul.f32 %v958, %v238
    %v963 = vmul.f32 %v961, %v238
    %v964 = vsub.f32 %v954, %v962
    %v965 = vsub.f32 %v955, %v963
    %v966 = vmul.f32 %v964, %v964
    %v967 = vmul.f32 %v965, %v965
    %v968 = vsel %vm224, %v966, 0.0
    %969 = vadd.xlane.f32.xlu0 %v968
    %v970 = vpop.xlane.xlu0 %969
    %v971 = vsel %vm228, %v967, 0.0
    %972 = vadd.xlane.f32.xlu0 %v971
    %v973 = vpop.xlane.xlu0 %972
    %v974 = vmul.f32 %v970, %v238
    %v975 = vmul.f32 %v973, %v238
    %v976 = vadd.f32 %v974, 1e-05
    %v977 = vadd.f32 %v975, 1e-05
    %v978 = vrsqrt.pop %v976
    %v979 = vmul.f32 %v978, %v976
    %v980 = vmul.f32 %v979, %v978
    %v981 = vmul.f32 0.5, %v980
    %v982 = vsub.f32 1.5, %v981
    %v983 = vmul.f32 %v978, %v982
    %vm984 = vweird.f32 %v976
    %vm985 = vweird.f32 %v978
    %vm986 = vmor %vm984, %vm985
    %v987 = vsel %vm986, %v978, %v983
    %v988 = vrsqrt.pop %v977
    %v989 = vmul.f32 %v988, %v977
    %v990 = vmul.f32 %v989, %v988
    %v991 = vmul.f32 0.5, %v990
    %v992 = vsub.f32 1.5, %v991
    %v993 = vmul.f32 %v988, %v992
    %vm994 = vweird.f32 %v977
    %vm995 = vweird.f32 %v988
    %vm996 = vmor %vm994, %vm995
    %v997 = vsel %vm996, %v988, %v993
    %v998 = vmul.f32 %v964, %v987
    %v999 = vmul.f32 %v965, %v997
    %v1000 = vperm.slane %v293, 3
    %v1001 = vmul.f32 %v998, %v1000
    %v1002 = vmul.f32 %v999, %v1000
    %v1003 = vperm.slane %v293, 4
    %v1004 = vadd.f32 %v1001, %v1003
    %v1005 = vadd.f32 %v1002, %v1003
    %v1006 = vld [vmem:[%s11] sm:$0xff]
    %v1007 = vld [vmem:[%s11 + $0x8] sm:$0xff]
    %v1008 = vld [vmem:[%s11 + $0x10] sm:$0xff]
    %v1009 = vld [vmem:[%s11 + $0x18] sm:$0xff]
    %v1010 = vld [vmem:[%s12] sm:$0x1]
    %v1011 = vperm.slane %v1010, 0
    %v1013 = vsel %vm224, %v1004, 0
    %v1016 = vsel %vm224, %v1005, 0
    %1018 = vmatpush.msra.mxu0 0.0
    %1019 = vmatpush.msra.mxu0 0.0
    %1020 = vmatpush.msra.mxu0 0.0
    %1021 = vmatpush.msra.mxu0 0.0
    %1022 = vmatpush.msra.mxu0 0.0
    %1023 = vmatpush.msra.mxu0 0.0
    %1024 = vmatpush.msra.mxu0 0.0
    %1025 = vmatpush.msra.mxu0 0.0
    %1026 = vmatpush.msra.mxu0 0.0
    %1027 = vmatpush.msra.mxu0 0.0
    %1028 = vmatpush.msra.mxu0 0.0
    %1029 = vmatpush.msra.mxu0 0.0
    %1030 = vmatpush.msra.mxu0 %v1009
    %1031 = vmatpush.msra.mxu0 %v1008
    %1032 = vmatpush.msra.mxu0 %v1007
    %1033 = vmatpush.msra.mxu0 %v1006
    %1034 = vmatmul.f32.gmra.mxu0 %v1013
    %v1035 = vpop.f32.mrf.mxu0
    %v1036 = vadd.f32 %v1011, %v1035
    %1037 = vmatmul.f32.gmra.mxu0 %v1016
    %v1038 = vpop.f32.mrf.mxu0
    %v1039 = vadd.f32 %v1011, %v1038
    %1040 = vdwg.mxu0
    %v1041 = vmul.f32 %v1036, %v1036
    %v1042 = vmul.f32 %v1039, %v1039
    %v1043 = vmul.f32 %v1036, %v1041
    %v1044 = vmul.f32 %v1039, %v1042
    %v1045 = vmul.f32 %v1043, 0.044715
    %v1046 = vmul.f32 %v1044, 0.044715
    %v1047 = vadd.f32 %v1036, %v1045
    %v1048 = vadd.f32 %v1039, %v1046
    %v1049 = vmul.f32 %v1047, 0.7978846
    %v1050 = vmul.f32 %v1048, 0.7978846
    %v1051 = vtanh.pop %v1049
    %v1052 = vtanh.pop %v1050
    %v1053 = vadd.f32 %v1051, 1.0
    %v1054 = vadd.f32 %v1052, 1.0
    %v1055 = vmul.f32 %v1053, 0.5
    %v1056 = vmul.f32 %v1054, 0.5
    %v1057 = vmul.f32 %v1036, %v1055
    %v1058 = vmul.f32 %v1039, %v1056
    %v1059 = vld [vmem:[%s13] sm:$0xff]
    %v1060 = vld [vmem:[%s13 + $0x8] sm:$0xff]
    %v1061 = vld [vmem:[%s13 + $0x10] sm:$0xff]
    %v1062 = vld [vmem:[%s13 + $0x18] sm:$0xff]
    %v1063 = vld [vmem:[%s13 + $0x20] sm:$0xff]
    %v1064 = vld [vmem:[%s13 + $0x28] sm:$0xff]
    %v1065 = vld [vmem:[%s13 + $0x30] sm:$0xff]
    %v1066 = vld [vmem:[%s13 + $0x38] sm:$0xff]
    %v1068 = vsel %vm60, %v1057, 0
    %v1071 = vsel %vm60, %v1058, 0
    %1073 = vmatpush.msra.mxu0 0.0
    %1074 = vmatpush.msra.mxu0 0.0
    %1075 = vmatpush.msra.mxu0 0.0
    %1076 = vmatpush.msra.mxu0 0.0
    %1077 = vmatpush.msra.mxu0 0.0
    %1078 = vmatpush.msra.mxu0 0.0
    %1079 = vmatpush.msra.mxu0 0.0
    %1080 = vmatpush.msra.mxu0 0.0
    %1081 = vmatpush.msra.mxu0 %v1066
    %1082 = vmatpush.msra.mxu0 %v1065
    %1083 = vmatpush.msra.mxu0 %v1064
    %1084 = vmatpush.msra.mxu0 %v1063
    %1085 = vmatpush.msra.mxu0 %v1062
    %1086 = vmatpush.msra.mxu0 %v1061
    %1087 = vmatpush.msra.mxu0 %v1060
    %1088 = vmatpush.msra.mxu0 %v1059
    %1089 = vmatmul.f32.gmra.mxu0 %v1068
    %v1090 = vpop.f32.mrf.mxu0
    %v1091 = vadd.f32 0.0, %v1090
    %1092 = vmatmul.f32.gmra.mxu0 %v1071
    %v1093 = vpop.f32.mrf.mxu0
    %v1094 = vadd.f32 0.0, %v1093
    %1095 = vdwg.mxu0
    %v1096 = vadd.f32 %v954, %v1091
    %v1097 = vadd.f32 %v955, %v1094
    %v1098 = vperm.slane %v293, 5
    %v1099 = vadd.f32 %v1096, %v1098
    %v1100 = vadd.f32 %v1097, %v1098
    %s1101 = scalar_lea.vmem %s8, 8
    %v1102 = vld [vmem:[%s1101] sm:$0x3f]
    %v1103 = vsel %vm224, %v1099, 0.0
    %1104 = vadd.xlane.f32.xlu0 %v1103
    %v1105 = vpop.xlane.xlu0 %1104
    %v1106 = vsel %vm228, %v1100, 0.0
    %1107 = vadd.xlane.f32.xlu0 %v1106
    %v1108 = vpop.xlane.xlu0 %1107
    %v1109 = vmul.f32 %v1105, %v238
    %v1110 = vmul.f32 %v1108, %v238
    %v1111 = vsub.f32 %v1099, %v1109
    %v1112 = vsub.f32 %v1100, %v1110
    %v1113 = vmul.f32 %v1111, %v1111
    %v1114 = vmul.f32 %v1112, %v1112
    %v1115 = vsel %vm224, %v1113, 0.0
    %1116 = vadd.xlane.f32.xlu0 %v1115
    %v1117 = vpop.xlane.xlu0 %1116
    %v1118 = vsel %vm228, %v1114, 0.0
    %1119 = vadd.xlane.f32.xlu0 %v1118
    %v1120 = vpop.xlane.xlu0 %1119
    %v1121 = vmul.f32 %v1117, %v238
    %v1122 = vmul.f32 %v1120, %v238
    %v1123 = vadd.f32 %v1121, 1e-05
    %v1124 = vadd.f32 %v1122, 1e-05
    %v1125 = vrsqrt.pop %v1123
    %v1126 = vmul.f32 %v1125, %v1123
    %v1127 = vmul.f32 %v1126, %v1125
    %v1128 = vmul.f32 0.5, %v1127
    %v1129 = vsub.f32 1.5, %v1128
    %v1130 = vmul.f32 %v1125, %v1129
    %vm1131 = vweird.f32 %v1123
    %vm1132 = vweird.f32 %v1125
    %vm1133 = vmor %vm1131, %vm1132
    %v1134 = vsel %vm1133, %v1125, %v1130
    %v1135 = vrsqrt.pop %v1124
    %v1136 = vmul.f32 %v1135, %v1124
    %v1137 = vmul.f32 %v1136, %v1135
    %v1138 = vmul.f32 0.5, %v1137
    %v1139 = vsub.f32 1.5, %v1138
    %v1140 = vmul.f32 %v1135, %v1139
    %vm1141 = vweird.f32 %v1124
    %vm1142 = vweird.f32 %v1135
    %vm1143 = vmor %vm1141, %vm1142
    %v1144 = vsel %vm1143, %v1135, %v1140
    %v1145 = vmul.f32 %v1111, %v1134
    %v1146 = vmul.f32 %v1112, %v1144
    %v1147 = vperm.slane %v1102, 0
    %v1148 = vmul.f32 %v1145, %v1147
    %v1149 = vmul.f32 %v1146, %v1147
    %v1150 = vperm.slane %v1102, 1
    %v1151 = vadd.f32 %v1148, %v1150
    %v1152 = vadd.f32 %v1149, %v1150
    %s1153 = scalar_lea.vmem %s9, 32
    %v1154 = vld [vmem:[%s1153] sm:$0xff]
    %v1155 = vld [vmem:[%s1153 + $0x8] sm:$0xff]
    %v1156 = vld [vmem:[%s1153 + $0x10] sm:$0xff]
    %v1157 = vld [vmem:[%s1153 + $0x18] sm:$0xff]
    %v1159 = vsel %vm224, %v1151, 0
    %v1162 = vsel %vm224, %v1152, 0
    %1164 = vmatpush.msra.mxu0 0.0
    %1165 = vmatpush.msra.mxu0 0.0
    %1166 = vmatpush.msra.mxu0 0.0
    %1167 = vmatpush.msra.mxu0 0.0
    %1168 = vmatpush.msra.mxu0 0.0
    %1169 = vmatpush.msra.mxu0 0.0
    %1170 = vmatpush.msra.mxu0 0.0
    %1171 = vmatpush.msra.mxu0 0.0
    %1172 = vmatpush.msra.mxu0 0.0
    %1173 = vmatpush.msra.mxu0 0.0
    %1174 = vmatpush.msra.mxu0 0.0
    %1175 = vmatpush.msra.mxu0 0.0
    %1176 = vmatpush.msra.mxu0 %v1157
    %1177 = vmatpush.msra.mxu0 %v1156
    %1178 = vmatpush.msra.mxu0 %v1155
    %1179 = vmatpush.msra.mxu0 %v1154
    %1180 = vmatmul.f32.gmra.mxu0 %v1159
    %v1181 = vpop.f32.mrf.mxu0
    %v1182 = vadd.f32 0.0, %v1181
    %1183 = vmatmul.f32.gmra.mxu0 %v1162
    %v1184 = vpop.f32.mrf.mxu0
    %v1185 = vadd.f32 0.0, %v1184
    %1186 = vdwg.mxu0
    %1189 = vrot.lane.b32.xlu0 %v1182, 96
    %v1190 = vpop.permute.xlu0 %1189
    %1191 = vrot.lane.b32.xlu0 %v1185, 96
    %v1192 = vpop.permute.xlu0 %1191
    %v1193 = vsel %vm383, %v1182, 0
    %v1195 = vsel %vm383, %v1185, 0
    %v1197 = vsel %vm383, %v1190, 0
    %v1199 = vsel %vm383, %v1192, 0
    %1201 = vmatpush.xpose.msra.mxu0 0.0
    %1202 = vmatpush.xpose.msra.mxu0 0.0
    %1203 = vmatpush.xpose.msra.mxu0 0.0
    %1204 = vmatpush.xpose.msra.mxu0 0.0
    %1205 = vmatpush.xpose.msra.mxu0 0.0
    %1206 = vmatpush.xpose.msra.mxu0 0.0
    %1207 = vmatpush.xpose.msra.mxu0 0.0
    %1208 = vmatpush.xpose.msra.mxu0 0.0
    %1209 = vmatpush.xpose.msra.mxu0 0.0
    %1210 = vmatpush.xpose.msra.mxu0 0.0
    %1211 = vmatpush.xpose.msra.mxu0 0.0
    %1212 = vmatpush.xpose.msra.mxu0 0.0
    %1213 = vmatpush.xpose.msra.mxu0 0.0
    %1214 = vmatpush.xpose.msra.mxu0 0.0
    %1215 = vmatpush.xpose.msra.mxu0 %v1199
    %1216 = vmatpush.xpose.msra.mxu0 %v1197
    %1217 = vmatmul.f32.gmra.mxu0 %v1193
    %v1218 = vpop.f32.mrf.mxu0
    %v1219 = vadd.f32 0.0, %v1218
    %1220 = vmatmul.f32.gmra.mxu0 %v1195
    %v1221 = vpop.f32.mrf.mxu0
    %v1222 = vadd.f32 0.0, %v1221
    %1223 = vdwg.mxu0
    %v1224 = vmul.f32 %v1219, 0.35355338
    %v1225 = vmul.f32 %v1222, 0.35355338
    %v1226 = vadd.f32 %v1224, %v291
    %v1227 = vadd.f32 %v1225, %v292
    %v1228 = vsel %vm419, %v1226, -inf
    %1229 = vmax.xlane.f32.xlu0 %v1228
    %v1230 = vpop.xlane.xlu0 %1229
    %v1231 = vsel %vm423, %v1227, -inf
    %1232 = vmax.xlane.f32.xlu0 %v1231
    %v1233 = vpop.xlane.xlu0 %1232
    %v1234 = vsub.f32 %v1226, %v1230
    %v1235 = vsub.f32 %v1227, %v1233
    %v1236 = vmul.f32 %v1234, 1.442695
    %v1237 = vpow.pop %v1236
    %v1238 = vmul.f32 %v1235, 1.442695
    %v1239 = vpow.pop %v1238
    %v1240 = vsel %vm419, %v1237, 0.0
    %1241 = vadd.xlane.f32.xlu0 %v1240
    %v1242 = vpop.xlane.xlu0 %1241
    %v1243 = vsel %vm423, %v1239, 0.0
    %1244 = vadd.xlane.f32.xlu0 %v1243
    %v1245 = vpop.xlane.xlu0 %1244
    %v1246 = vrcp.pop %v1242
    %v1247 = vmul.f32 %v1242, %v1246
    %v1248 = vsub.f32 1.0, %v1247
    %v1249 = vmul.f32 %v1246, %v1248
    %v1250 = vadd.f32 %v1246, %v1249
    %vm1251 = vweird.f32 %v1242
    %vm1252 = vweird.f32 %v1246
    %vm1253 = vmor %vm1251, %vm1252
    %v1254 = vsel %vm1253, %v1246, %v1250
    %v1255 = vand.u32 2147483647, %v1242
    %vm1256 = vcmp.eq.f32.partialorder %v1255, 8.507059e+37
    %v1257 = vand.u32 %v1242, 2147483648
    %v1258 = vor.u32 1.1754944e-38, %v1257
    %v1259 = vsel %vm1256, %v1258, %v1254
    %v1260 = vmul.f32 %v1237, %v1259
    %v1261 = vrcp.pop %v1245
    %v1262 = vmul.f32 %v1245, %v1261
    %v1263 = vsub.f32 1.0, %v1262
    %v1264 = vmul.f32 %v1261, %v1263
    %v1265 = vadd.f32 %v1261, %v1264
    %vm1266 = vweird.f32 %v1245
    %vm1267 = vweird.f32 %v1261
    %vm1268 = vmor %vm1266, %vm1267
    %v1269 = vsel %vm1268, %v1261, %v1265
    %v1270 = vand.u32 2147483647, %v1245
    %vm1271 = vcmp.eq.f32.partialorder %v1270, 8.507059e+37
    %v1272 = vand.u32 %v1245, 2147483648
    %v1273 = vor.u32 1.1754944e-38, %v1272
    %v1274 = vsel %vm1271, %v1273, %v1269
    %v1275 = vmul.f32 %v1239, %v1274
    %1276 = vrot.lane.b32.xlu0 %v1182, 64
    %v1277 = vpop.permute.xlu0 %1276
    %1278 = vrot.lane.b32.xlu0 %v1185, 64
    %v1279 = vpop.permute.xlu0 %1278
    %v1282 = vsel %vm419, %v1260, 0
    %v1285 = vsel %vm419, %v1275, 0
    %v1287 = vsel %vm65, %v1279, 0
    %1289 = vmatpush.msra.mxu0 0.0
    %1290 = vmatpush.msra.mxu0 0.0
    %1291 = vmatpush.msra.mxu0 0.0
    %1292 = vmatpush.msra.mxu0 0.0
    %1293 = vmatpush.msra.mxu0 0.0
    %1294 = vmatpush.msra.mxu0 0.0
    %1295 = vmatpush.msra.mxu0 0.0
    %1296 = vmatpush.msra.mxu0 0.0
    %1297 = vmatpush.msra.mxu0 0.0
    %1298 = vmatpush.msra.mxu0 0.0
    %1299 = vmatpush.msra.mxu0 0.0
    %1300 = vmatpush.msra.mxu0 0.0
    %1301 = vmatpush.msra.mxu0 0.0
    %1302 = vmatpush.msra.mxu0 0.0
    %1303 = vmatpush.msra.mxu0 %v1287
    %1304 = vmatpush.msra.mxu0 %v1277
    %1305 = vmatmul.f32.gmra.mxu0 %v1282
    %v1306 = vpop.f32.mrf.mxu0
    %v1307 = vadd.f32 0.0, %v1306
    %1308 = vmatmul.f32.gmra.mxu0 %v1285
    %v1309 = vpop.f32.mrf.mxu0
    %v1310 = vadd.f32 0.0, %v1309
    %1311 = vdwg.mxu0
    %1312 = vrot.lane.b32.xlu0 %v1182, 120
    %v1313 = vpop.permute.xlu0 %1312
    %1314 = vrot.lane.b32.xlu0 %v1185, 120
    %v1315 = vpop.permute.xlu0 %1314
    %1316 = vrot.lane.b32.xlu0 %v1182, 88
    %v1317 = vpop.permute.xlu0 %1316
    %1318 = vrot.lane.b32.xlu0 %v1185, 88
    %v1319 = vpop.permute.xlu0 %1318
    %v1320 = vsel %vm383, %v1313, 0
    %v1322 = vsel %vm383, %v1315, 0
    %v1324 = vsel %vm383, %v1317, 0
    %v1326 = vsel %vm383, %v1319, 0
    %1328 = vmatpush.xpose.msra.mxu0 0.0
    %1329 = vmatpush.xpose.msra.mxu0 0.0
    %1330 = vmatpush.xpose.msra.mxu0 0.0
    %1331 = vmatpush.xpose.msra.mxu0 0.0
    %1332 = vmatpush.xpose.msra.mxu0 0.0
    %1333 = vmatpush.xpose.msra.mxu0 0.0
    %1334 = vmatpush.xpose.msra.mxu0 0.0
    %1335 = vmatpush.xpose.msra.mxu0 0.0
    %1336 = vmatpush.xpose.msra.mxu0 0.0
    %1337 = vmatpush.xpose.msra.mxu0 0.0
    %1338 = vmatpush.xpose.msra.mxu0 0.0
    %1339 = vmatpush.xpose.msra.mxu0 0.0
    %1340 = vmatpush.xpose.msra.mxu0 0.0
    %1341 = vmatpush.xpose.msra.mxu0 0.0
    %1342 = vmatpush.xpose.msra.mxu0 %v1326
    %1343 = vmatpush.xpose.msra.mxu0 %v1324
    %1344 = vmatmul.f32.gmra.mxu0 %v1320
    %v1345 = vpop.f32.mrf.mxu0
    %v1346 = vadd.f32 0.0, %v1345
    %1347 = vmatmul.f32.gmra.mxu0 %v1322
    %v1348 = vpop.f32.mrf.mxu0
    %v1349 = vadd.f32 0.0, %v1348
    %1350 = vdwg.mxu0
    %v1351 = vmul.f32 %v1346, 0.35355338
    %v1352 = vmul.f32 %v1349, 0.35355338
    %v1353 = vadd.f32 %v1351, %v291
    %v1354 = vadd.f32 %v1352, %v292
    %v1355 = vsel %vm419, %v1353, -inf
    %1356 = vmax.xlane.f32.xlu0 %v1355
    %v1357 = vpop.xlane.xlu0 %1356
    %v1358 = vsel %vm423, %v1354, -inf
    %1359 = vmax.xlane.f32.xlu0 %v1358
    %v1360 = vpop.xlane.xlu0 %1359
    %v1361 = vsub.f32 %v1353, %v1357
    %v1362 = vsub.f32 %v1354, %v1360
    %v1363 = vmul.f32 %v1361, 1.442695
    %v1364 = vpow.pop %v1363
    %v1365 = vmul.f32 %v1362, 1.442695
    %v1366 = vpow.pop %v1365
    %v1367 = vsel %vm419, %v1364, 0.0
    %1368 = vadd.xlane.f32.xlu0 %v1367
    %v1369 = vpop.xlane.xlu0 %1368
    %v1370 = vsel %vm423, %v1366, 0.0
    %1371 = vadd.xlane.f32.xlu0 %v1370
    %v1372 = vpop.xlane.xlu0 %1371
    %v1373 = vrcp.pop %v1369
    %v1374 = vmul.f32 %v1369, %v1373
    %v1375 = vsub.f32 1.0, %v1374
    %v1376 = vmul.f32 %v1373, %v1375
    %v1377 = vadd.f32 %v1373, %v1376
    %vm1378 = vweird.f32 %v1369
    %vm1379 = vweird.f32 %v1373
    %vm1380 = vmor %vm1378, %vm1379
    %v1381 = vsel %vm1380, %v1373, %v1377
    %v1382 = vand.u32 2147483647, %v1369
    %vm1383 = vcmp.eq.f32.partialorder %v1382, 8.507059e+37
    %v1384 = vand.u32 %v1369, 2147483648
    %v1385 = vor.u32 1.1754944e-38, %v1384
    %v1386 = vsel %vm1383, %v1385, %v1381
    %v1387 = vmul.f32 %v1364, %v1386
    %v1388 = vrcp.pop %v1372
    %v1389 = vmul.f32 %v1372, %v1388
    %v1390 = vsub.f32 1.0, %v1389
    %v1391 = vmul.f32 %v1388, %v1390
    %v1392 = vadd.f32 %v1388, %v1391
    %vm1393 = vweird.f32 %v1372
    %vm1394 = vweird.f32 %v1388
    %vm1395 = vmor %vm1393, %vm1394
    %v1396 = vsel %vm1395, %v1388, %v1392
    %v1397 = vand.u32 2147483647, %v1372
    %vm1398 = vcmp.eq.f32.partialorder %v1397, 8.507059e+37
    %v1399 = vand.u32 %v1372, 2147483648
    %v1400 = vor.u32 1.1754944e-38, %v1399
    %v1401 = vsel %vm1398, %v1400, %v1396
    %v1402 = vmul.f32 %v1366, %v1401
    %1403 = vrot.lane.b32.xlu0 %v1182, 56
    %v1404 = vpop.permute.xlu0 %1403
    %1405 = vrot.lane.b32.xlu0 %v1185, 56
    %v1406 = vpop.permute.xlu0 %1405
    %v1409 = vsel %vm419, %v1387, 0
    %v1412 = vsel %vm419, %v1402, 0
    %v1414 = vsel %vm65, %v1406, 0
    %1416 = vmatpush.msra.mxu0 0.0
    %1417 = vmatpush.msra.mxu0 0.0
    %1418 = vmatpush.msra.mxu0 0.0
    %1419 = vmatpush.msra.mxu0 0.0
    %1420 = vmatpush.msra.mxu0 0.0
    %1421 = vmatpush.msra.mxu0 0.0
    %1422 = vmatpush.msra.mxu0 0.0
    %1423 = vmatpush.msra.mxu0 0.0
    %1424 = vmatpush.msra.mxu0 0.0
    %1425 = vmatpush.msra.mxu0 0.0
    %1426 = vmatpush.msra.mxu0 0.0
    %1427 = vmatpush.msra.mxu0 0.0
    %1428 = vmatpush.msra.mxu0 0.0
    %1429 = vmatpush.msra.mxu0 0.0
    %1430 = vmatpush.msra.mxu0 %v1414
    %1431 = vmatpush.msra.mxu0 %v1404
    %1432 = vmatmul.f32.gmra.mxu0 %v1409
    %v1433 = vpop.f32.mrf.mxu0
    %v1434 = vadd.f32 0.0, %v1433
    %1435 = vmatmul.f32.gmra.mxu0 %v1412
    %v1436 = vpop.f32.mrf.mxu0
    %v1437 = vadd.f32 0.0, %v1436
    %1438 = vdwg.mxu0
    %1439 = vrot.lane.b32.xlu0 %v1182, 112
    %v1440 = vpop.permute.xlu0 %1439
    %1441 = vrot.lane.b32.xlu0 %v1185, 112
    %v1442 = vpop.permute.xlu0 %1441
    %1443 = vrot.lane.b32.xlu0 %v1182, 80
    %v1444 = vpop.permute.xlu0 %1443
    %1445 = vrot.lane.b32.xlu0 %v1185, 80
    %v1446 = vpop.permute.xlu0 %1445
    %v1447 = vsel %vm383, %v1440, 0
    %v1449 = vsel %vm383, %v1442, 0
    %v1451 = vsel %vm383, %v1444, 0
    %v1453 = vsel %vm383, %v1446, 0
    %1455 = vmatpush.xpose.msra.mxu0 0.0
    %1456 = vmatpush.xpose.msra.mxu0 0.0
    %1457 = vmatpush.xpose.msra.mxu0 0.0
    %1458 = vmatpush.xpose.msra.mxu0 0.0
    %1459 = vmatpush.xpose.msra.mxu0 0.0
    %1460 = vmatpush.xpose.msra.mxu0 0.0
    %1461 = vmatpush.xpose.msra.mxu0 0.0
    %1462 = vmatpush.xpose.msra.mxu0 0.0
    %1463 = vmatpush.xpose.msra.mxu0 0.0
    %1464 = vmatpush.xpose.msra.mxu0 0.0
    %1465 = vmatpush.xpose.msra.mxu0 0.0
    %1466 = vmatpush.xpose.msra.mxu0 0.0
    %1467 = vmatpush.xpose.msra.mxu0 0.0
    %1468 = vmatpush.xpose.msra.mxu0 0.0
    %1469 = vmatpush.xpose.msra.mxu0 %v1453
    %1470 = vmatpush.xpose.msra.mxu0 %v1451
    %1471 = vmatmul.f32.gmra.mxu0 %v1447
    %v1472 = vpop.f32.mrf.mxu0
    %v1473 = vadd.f32 0.0, %v1472
    %1474 = vmatmul.f32.gmra.mxu0 %v1449
    %v1475 = vpop.f32.mrf.mxu0
    %v1476 = vadd.f32 0.0, %v1475
    %1477 = vdwg.mxu0
    %v1478 = vmul.f32 %v1473, 0.35355338
    %v1479 = vmul.f32 %v1476, 0.35355338
    %v1480 = vadd.f32 %v1478, %v291
    %v1481 = vadd.f32 %v1479, %v292
    %v1482 = vsel %vm419, %v1480, -inf
    %1483 = vmax.xlane.f32.xlu0 %v1482
    %v1484 = vpop.xlane.xlu0 %1483
    %v1485 = vsel %vm423, %v1481, -inf
    %1486 = vmax.xlane.f32.xlu0 %v1485
    %v1487 = vpop.xlane.xlu0 %1486
    %v1488 = vsub.f32 %v1480, %v1484
    %v1489 = vsub.f32 %v1481, %v1487
    %v1490 = vmul.f32 %v1488, 1.442695
    %v1491 = vpow.pop %v1490
    %v1492 = vmul.f32 %v1489, 1.442695
    %v1493 = vpow.pop %v1492
    %v1494 = vsel %vm419, %v1491, 0.0
    %1495 = vadd.xlane.f32.xlu0 %v1494
    %v1496 = vpop.xlane.xlu0 %1495
    %v1497 = vsel %vm423, %v1493, 0.0
    %1498 = vadd.xlane.f32.xlu0 %v1497
    %v1499 = vpop.xlane.xlu0 %1498
    %v1500 = vrcp.pop %v1496
    %v1501 = vmul.f32 %v1496, %v1500
    %v1502 = vsub.f32 1.0, %v1501
    %v1503 = vmul.f32 %v1500, %v1502
    %v1504 = vadd.f32 %v1500, %v1503
    %vm1505 = vweird.f32 %v1496
    %vm1506 = vweird.f32 %v1500
    %vm1507 = vmor %vm1505, %vm1506
    %v1508 = vsel %vm1507, %v1500, %v1504
    %v1509 = vand.u32 2147483647, %v1496
    %vm1510 = vcmp.eq.f32.partialorder %v1509, 8.507059e+37
    %v1511 = vand.u32 %v1496, 2147483648
    %v1512 = vor.u32 1.1754944e-38, %v1511
    %v1513 = vsel %vm1510, %v1512, %v1508
    %v1514 = vmul.f32 %v1491, %v1513
    %v1515 = vrcp.pop %v1499
    %v1516 = vmul.f32 %v1499, %v1515
    %v1517 = vsub.f32 1.0, %v1516
    %v1518 = vmul.f32 %v1515, %v1517
    %v1519 = vadd.f32 %v1515, %v1518
    %vm1520 = vweird.f32 %v1499
    %vm1521 = vweird.f32 %v1515
    %vm1522 = vmor %vm1520, %vm1521
    %v1523 = vsel %vm1522, %v1515, %v1519
    %v1524 = vand.u32 2147483647, %v1499
    %vm1525 = vcmp.eq.f32.partialorder %v1524, 8.507059e+37
    %v1526 = vand.u32 %v1499, 2147483648
    %v1527 = vor.u32 1.1754944e-38, %v1526
    %v1528 = vsel %vm1525, %v1527, %v1523
    %v1529 = vmul.f32 %v1493, %v1528
    %1530 = vrot.lane.b32.xlu0 %v1182, 48
    %v1531 = vpop.permute.xlu0 %1530
    %1532 = vrot.lane.b32.xlu0 %v1185, 48
    %v1533 = vpop.permute.xlu0 %1532
    %v1536 = vsel %vm419, %v1514, 0
    %v1539 = vsel %vm419, %v1529, 0
    %v1541 = vsel %vm65, %v1533, 0
    %1543 = vmatpush.msra.mxu0 0.0
    %1544 = vmatpush.msra.mxu0 0.0
    %1545 = vmatpush.msra.mxu0 0.0
    %1546 = vmatpush.msra.mxu0 0.0
    %1547 = vmatpush.msra.mxu0 0.0
    %1548 = vmatpush.msra.mxu0 0.0
    %1549 = vmatpush.msra.mxu0 0.0
    %1550 = vmatpush.msra.mxu0 0.0
    %1551 = vmatpush.msra.mxu0 0.0
    %1552 = vmatpush.msra.mxu0 0.0
    %1553 = vmatpush.msra.mxu0 0.0
    %1554 = vmatpush.msra.mxu0 0.0
    %1555 = vmatpush.msra.mxu0 0.0
    %1556 = vmatpush.msra.mxu0 0.0
    %1557 = vmatpush.msra.mxu0 %v1541
    %1558 = vmatpush.msra.mxu0 %v1531
    %1559 = vmatmul.f32.gmra.mxu0 %v1536
    %v1560 = vpop.f32.mrf.mxu0
    %v1561 = vadd.f32 0.0, %v1560
    %1562 = vmatmul.f32.gmra.mxu0 %v1539
    %v1563 = vpop.f32.mrf.mxu0
    %v1564 = vadd.f32 0.0, %v1563
    %1565 = vdwg.mxu0
    %1566 = vrot.lane.b32.xlu0 %v1182, 104
    %v1567 = vpop.permute.xlu0 %1566
    %1568 = vrot.lane.b32.xlu0 %v1185, 104
    %v1569 = vpop.permute.xlu0 %1568
    %1570 = vrot.lane.b32.xlu0 %v1182, 72
    %v1571 = vpop.permute.xlu0 %1570
    %1572 = vrot.lane.b32.xlu0 %v1185, 72
    %v1573 = vpop.permute.xlu0 %1572
    %v1574 = vsel %vm383, %v1567, 0
    %v1576 = vsel %vm383, %v1569, 0
    %v1578 = vsel %vm383, %v1571, 0
    %v1580 = vsel %vm383, %v1573, 0
    %1582 = vmatpush.xpose.msra.mxu0 0.0
    %1583 = vmatpush.xpose.msra.mxu0 0.0
    %1584 = vmatpush.xpose.msra.mxu0 0.0
    %1585 = vmatpush.xpose.msra.mxu0 0.0
    %1586 = vmatpush.xpose.msra.mxu0 0.0
    %1587 = vmatpush.xpose.msra.mxu0 0.0
    %1588 = vmatpush.xpose.msra.mxu0 0.0
    %1589 = vmatpush.xpose.msra.mxu0 0.0
    %1590 = vmatpush.xpose.msra.mxu0 0.0
    %1591 = vmatpush.xpose.msra.mxu0 0.0
    %1592 = vmatpush.xpose.msra.mxu0 0.0
    %1593 = vmatpush.xpose.msra.mxu0 0.0
    %1594 = vmatpush.xpose.msra.mxu0 0.0
    %1595 = vmatpush.xpose.msra.mxu0 0.0
    %1596 = vmatpush.xpose.msra.mxu0 %v1580
    %1597 = vmatpush.xpose.msra.mxu0 %v1578
    %1598 = vmatmul.f32.gmra.mxu0 %v1574
    %v1599 = vpop.f32.mrf.mxu0
    %v1600 = vadd.f32 0.0, %v1599
    %1601 = vmatmul.f32.gmra.mxu0 %v1576
    %v1602 = vpop.f32.mrf.mxu0
    %v1603 = vadd.f32 0.0, %v1602
    %1604 = vdwg.mxu0
    %v1605 = vmul.f32 %v1600, 0.35355338
    %v1606 = vmul.f32 %v1603, 0.35355338
    %v1607 = vadd.f32 %v1605, %v291
    %v1608 = vadd.f32 %v1606, %v292
    %v1609 = vsel %vm419, %v1607, -inf
    %1610 = vmax.xlane.f32.xlu0 %v1609
    %v1611 = vpop.xlane.xlu0 %1610
    %v1612 = vsel %vm423, %v1608, -inf
    %1613 = vmax.xlane.f32.xlu0 %v1612
    %v1614 = vpop.xlane.xlu0 %1613
    %v1615 = vsub.f32 %v1607, %v1611
    %v1616 = vsub.f32 %v1608, %v1614
    %v1617 = vmul.f32 %v1615, 1.442695
    %v1618 = vpow.pop %v1617
    %v1619 = vmul.f32 %v1616, 1.442695
    %v1620 = vpow.pop %v1619
    %v1621 = vsel %vm419, %v1618, 0.0
    %1622 = vadd.xlane.f32.xlu0 %v1621
    %v1623 = vpop.xlane.xlu0 %1622
    %v1624 = vsel %vm423, %v1620, 0.0
    %1625 = vadd.xlane.f32.xlu0 %v1624
    %v1626 = vpop.xlane.xlu0 %1625
    %v1627 = vrcp.pop %v1623
    %v1628 = vmul.f32 %v1623, %v1627
    %v1629 = vsub.f32 1.0, %v1628
    %v1630 = vmul.f32 %v1627, %v1629
    %v1631 = vadd.f32 %v1627, %v1630
    %vm1632 = vweird.f32 %v1623
    %vm1633 = vweird.f32 %v1627
    %vm1634 = vmor %vm1632, %vm1633
    %v1635 = vsel %vm1634, %v1627, %v1631
    %v1636 = vand.u32 2147483647, %v1623
    %vm1637 = vcmp.eq.f32.partialorder %v1636, 8.507059e+37
    %v1638 = vand.u32 %v1623, 2147483648
    %v1639 = vor.u32 1.1754944e-38, %v1638
    %v1640 = vsel %vm1637, %v1639, %v1635
    %v1641 = vmul.f32 %v1618, %v1640
    %v1642 = vrcp.pop %v1626
    %v1643 = vmul.f32 %v1626, %v1642
    %v1644 = vsub.f32 1.0, %v1643
    %v1645 = vmul.f32 %v1642, %v1644
    %v1646 = vadd.f32 %v1642, %v1645
    %vm1647 = vweird.f32 %v1626
    %vm1648 = vweird.f32 %v1642
    %vm1649 = vmor %vm1647, %vm1648
    %v1650 = vsel %vm1649, %v1642, %v1646
    %v1651 = vand.u32 2147483647, %v1626
    %vm1652 = vcmp.eq.f32.partialorder %v1651, 8.507059e+37
    %v1653 = vand.u32 %v1626, 2147483648
    %v1654 = vor.u32 1.1754944e-38, %v1653
    %v1655 = vsel %vm1652, %v1654, %v1650
    %v1656 = vmul.f32 %v1620, %v1655
    %1657 = vrot.lane.b32.xlu0 %v1182, 40
    %v1658 = vpop.permute.xlu0 %1657
    %1659 = vrot.lane.b32.xlu0 %v1185, 40
    %v1660 = vpop.permute.xlu0 %1659
    %v1663 = vsel %vm419, %v1641, 0
    %v1666 = vsel %vm419, %v1656, 0
    %v1668 = vsel %vm65, %v1660, 0
    %1670 = vmatpush.msra.mxu0 0.0
    %1671 = vmatpush.msra.mxu0 0.0
    %1672 = vmatpush.msra.mxu0 0.0
    %1673 = vmatpush.msra.mxu0 0.0
    %1674 = vmatpush.msra.mxu0 0.0
    %1675 = vmatpush.msra.mxu0 0.0
    %1676 = vmatpush.msra.mxu0 0.0
    %1677 = vmatpush.msra.mxu0 0.0
    %1678 = vmatpush.msra.mxu0 0.0
    %1679 = vmatpush.msra.mxu0 0.0
    %1680 = vmatpush.msra.mxu0 0.0
    %1681 = vmatpush.msra.mxu0 0.0
    %1682 = vmatpush.msra.mxu0 0.0
    %1683 = vmatpush.msra.mxu0 0.0
    %1684 = vmatpush.msra.mxu0 %v1668
    %1685 = vmatpush.msra.mxu0 %v1658
    %1686 = vmatmul.f32.gmra.mxu0 %v1663
    %v1687 = vpop.f32.mrf.mxu0
    %v1688 = vadd.f32 0.0, %v1687
    %1689 = vmatmul.f32.gmra.mxu0 %v1666
    %v1690 = vpop.f32.mrf.mxu0
    %v1691 = vadd.f32 0.0, %v1690
    %1692 = vdwg.mxu0
    %1695 = vrot.lane.b32.xlu0 %v1434, 8
    %v1696 = vpop.permute.xlu0 %1695
    %1697 = vrot.lane.b32.xlu0 %v1437, 8
    %v1698 = vpop.permute.xlu0 %1697
    %1703 = vrot.lane.b32.xlu0 %v1561, 16
    %v1704 = vpop.permute.xlu0 %1703
    %1705 = vrot.lane.b32.xlu0 %v1564, 16
    %v1706 = vpop.permute.xlu0 %1705
    %1711 = vrot.lane.b32.xlu0 %v1688, 24
    %v1712 = vpop.permute.xlu0 %1711
    %1713 = vrot.lane.b32.xlu0 %v1691, 24
    %v1714 = vpop.permute.xlu0 %1713
    %v1717 = vsel %vm383, %v1307, %v1696
    %v1718 = vsel %vm383, %v1310, %v1698
    %v1719 = vsel %vm912, %v1717, %v1704
    %v1720 = vsel %vm912, %v1718, %v1706
    %v1721 = vsel %vm915, %v1719, %v1712
    %v1722 = vsel %vm915, %v1720, %v1714
    %s1723 = scalar_lea.vmem %s10, 32
    %v1724 = vld [vmem:[%s1723] sm:$0xff]
    %v1725 = vld [vmem:[%s1723 + $0x8] sm:$0xff]
    %v1726 = vld [vmem:[%s1723 + $0x10] sm:$0xff]
    %v1727 = vld [vmem:[%s1723 + $0x18] sm:$0xff]
    %v1729 = vsel %vm224, %v1721, 0
    %v1732 = vsel %vm224, %v1722, 0
    %1734 = vmatpush.msra.mxu0 0.0
    %1735 = vmatpush.msra.mxu0 0.0
    %1736 = vmatpush.msra.mxu0 0.0
    %1737 = vmatpush.msra.mxu0 0.0
    %1738 = vmatpush.msra.mxu0 0.0
    %1739 = vmatpush.msra.mxu0 0.0
    %1740 = vmatpush.msra.mxu0 0.0
    %1741 = vmatpush.msra.mxu0 0.0
    %1742 = vmatpush.msra.mxu0 0.0
    %1743 = vmatpush.msra.mxu0 0.0
    %1744 = vmatpush.msra.mxu0 0.0
    %1745 = vmatpush.msra.mxu0 0.0
    %1746 = vmatpush.msra.mxu0 %v1727
    %1747 = vmatpush.msra.mxu0 %v1726
    %1748 = vmatpush.msra.mxu0 %v1725
    %1749 = vmatpush.msra.mxu0 %v1724
    %1750 = vmatmul.f32.gmra.mxu0 %v1729
    %v1751 = vpop.f32.mrf.mxu0
    %v1752 = vadd.f32 0.0, %v1751
    %1753 = vmatmul.f32.gmra.mxu0 %v1732
    %v1754 = vpop.f32.mrf.mxu0
    %v1755 = vadd.f32 0.0, %v1754
    %1756 = vdwg.mxu0
    %v1757 = vadd.f32 %v1099, %v1752
    %v1758 = vadd.f32 %v1100, %v1755
    %v1759 = vperm.slane %v1102, 2
    %v1760 = vadd.f32 %v1757, %v1759
    %v1761 = vadd.f32 %v1758, %v1759
    %v1762 = vsel %vm224, %v1760, 0.0
    %1763 = vadd.xlane.f32.xlu0 %v1762
    %v1764 = vpop.xlane.xlu0 %1763
    %v1765 = vsel %vm228, %v1761, 0.0
    %1766 = vadd.xlane.f32.xlu0 %v1765
    %v1767 = vpop.xlane.xlu0 %1766
    %v1768 = vmul.f32 %v1764, %v238
    %v1769 = vmul.f32 %v1767, %v238
    %v1770 = vsub.f32 %v1760, %v1768
    %v1771 = vsub.f32 %v1761, %v1769
    %v1772 = vmul.f32 %v1770, %v1770
    %v1773 = vmul.f32 %v1771, %v1771
    %v1774 = vsel %vm224, %v1772, 0.0
    %1775 = vadd.xlane.f32.xlu0 %v1774
    %v1776 = vpop.xlane.xlu0 %1775
    %v1777 = vsel %vm228, %v1773, 0.0
    %1778 = vadd.xlane.f32.xlu0 %v1777
    %v1779 = vpop.xlane.xlu0 %1778
    %v1780 = vmul.f32 %v1776, %v238
    %v1781 = vmul.f32 %v1779, %v238
    %v1782 = vadd.f32 %v1780, 1e-05
    %v1783 = vadd.f32 %v1781, 1e-05
    %v1784 = vrsqrt.pop %v1782
    %v1785 = vmul.f32 %v1784, %v1782
    %v1786 = vmul.f32 %v1785, %v1784
    %v1787 = vmul.f32 0.5, %v1786
    %v1788 = vsub.f32 1.5, %v1787
    %v1789 = vmul.f32 %v1784, %v1788
    %vm1790 = vweird.f32 %v1782
    %vm1791 = vweird.f32 %v1784
    %vm1792 = vmor %vm1790, %vm1791
    %v1793 = vsel %vm1792, %v1784, %v1789
    %v1794 = vrsqrt.pop %v1783
    %v1795 = vmul.f32 %v1794, %v1783
    %v1796 = vmul.f32 %v1795, %v1794
    %v1797 = vmul.f32 0.5, %v1796
    %v1798 = vsub.f32 1.5, %v1797
    %v1799 = vmul.f32 %v1794, %v1798
    %vm1800 = vweird.f32 %v1783
    %vm1801 = vweird.f32 %v1794
    %vm1802 = vmor %vm1800, %vm1801
    %v1803 = vsel %vm1802, %v1794, %v1799
    %v1804 = vmul.f32 %v1770, %v1793
    %v1805 = vmul.f32 %v1771, %v1803
    %v1806 = vperm.slane %v1102, 3
    %v1807 = vmul.f32 %v1804, %v1806
    %v1808 = vmul.f32 %v1805, %v1806
    %v1809 = vperm.slane %v1102, 4
    %v1810 = vadd.f32 %v1807, %v1809
    %v1811 = vadd.f32 %v1808, %v1809
    %s1812 = scalar_lea.vmem %s11, 32
    %v1813 = vld [vmem:[%s1812] sm:$0xff]
    %v1814 = vld [vmem:[%s1812 + $0x8] sm:$0xff]
    %v1815 = vld [vmem:[%s1812 + $0x10] sm:$0xff]
    %v1816 = vld [vmem:[%s1812 + $0x18] sm:$0xff]
    %v1817 = vld [vmem:[%s12 + $0x1] sm:$0x1]
    %v1818 = vperm.slane %v1817, 0
    %v1820 = vsel %vm224, %v1810, 0
    %v1823 = vsel %vm224, %v1811, 0
    %1825 = vmatpush.msra.mxu0 0.0
    %1826 = vmatpush.msra.mxu0 0.0
    %1827 = vmatpush.msra.mxu0 0.0
    %1828 = vmatpush.msra.mxu0 0.0
    %1829 = vmatpush.msra.mxu0 0.0
    %1830 = vmatpush.msra.mxu0 0.0
    %1831 = vmatpush.msra.mxu0 0.0
    %1832 = vmatpush.msra.mxu0 0.0
    %1833 = vmatpush.msra.mxu0 0.0
    %1834 = vmatpush.msra.mxu0 0.0
    %1835 = vmatpush.msra.mxu0 0.0
    %1836 = vmatpush.msra.mxu0 0.0
    %1837 = vmatpush.msra.mxu0 %v1816
    %1838 = vmatpush.msra.mxu0 %v1815
    %1839 = vmatpush.msra.mxu0 %v1814
    %1840 = vmatpush.msra.mxu0 %v1813
    %1841 = vmatmul.f32.gmra.mxu0 %v1820
    %v1842 = vpop.f32.mrf.mxu0
    %v1843 = vadd.f32 %v1818, %v1842
    %1844 = vmatmul.f32.gmra.mxu0 %v1823
    %v1845 = vpop.f32.mrf.mxu0
    %v1846 = vadd.f32 %v1818, %v1845
    %1847 = vdwg.mxu0
    %v1848 = vmul.f32 %v1843, %v1843
    %v1849 = vmul.f32 %v1846, %v1846
    %v1850 = vmul.f32 %v1843, %v1848
    %v1851 = vmul.f32 %v1846, %v1849
    %v1852 = vmul.f32 %v1850, 0.044715
    %v1853 = vmul.f32 %v1851, 0.044715
    %v1854 = vadd.f32 %v1843, %v1852
    %v1855 = vadd.f32 %v1846, %v1853
    %v1856 = vmul.f32 %v1854, 0.7978846
    %v1857 = vmul.f32 %v1855, 0.7978846
    %v1858 = vtanh.pop %v1856
    %v1859 = vtanh.pop %v1857
    %v1860 = vadd.f32 %v1858, 1.0
    %v1861 = vadd.f32 %v1859, 1.0
    %v1862 = vmul.f32 %v1860, 0.5
    %v1863 = vmul.f32 %v1861, 0.5
    %v1864 = vmul.f32 %v1843, %v1862
    %v1865 = vmul.f32 %v1846, %v1863
    %s1866 = scalar_lea.vmem %s13, 64
    %v1867 = vld [vmem:[%s1866] sm:$0xff]
    %v1868 = vld [vmem:[%s1866 + $0x8] sm:$0xff]
    %v1869 = vld [vmem:[%s1866 + $0x10] sm:$0xff]
    %v1870 = vld [vmem:[%s1866 + $0x18] sm:$0xff]
    %v1871 = vld [vmem:[%s1866 + $0x20] sm:$0xff]
    %v1872 = vld [vmem:[%s1866 + $0x28] sm:$0xff]
    %v1873 = vld [vmem:[%s1866 + $0x30] sm:$0xff]
    %v1874 = vld [vmem:[%s1866 + $0x38] sm:$0xff]
    %v1876 = vsel %vm60, %v1864, 0
    %v1879 = vsel %vm60, %v1865, 0
    %1881 = vmatpush.msra.mxu0 0.0
    %1882 = vmatpush.msra.mxu0 0.0
    %1883 = vmatpush.msra.mxu0 0.0
    %1884 = vmatpush.msra.mxu0 0.0
    %1885 = vmatpush.msra.mxu0 0.0
    %1886 = vmatpush.msra.mxu0 0.0
    %1887 = vmatpush.msra.mxu0 0.0
    %1888 = vmatpush.msra.mxu0 0.0
    %1889 = vmatpush.msra.mxu0 %v1874
    %1890 = vmatpush.msra.mxu0 %v1873
    %1891 = vmatpush.msra.mxu0 %v1872
    %1892 = vmatpush.msra.mxu0 %v1871
    %1893 = vmatpush.msra.mxu0 %v1870
    %1894 = vmatpush.msra.mxu0 %v1869
    %1895 = vmatpush.msra.mxu0 %v1868
    %1896 = vmatpush.msra.mxu0 %v1867
    %1897 = vmatmul.f32.gmra.mxu0 %v1876
    %v1898 = vpop.f32.mrf.mxu0
    %v1899 = vadd.f32 0.0, %v1898
    %1900 = vmatmul.f32.gmra.mxu0 %v1879
    %v1901 = vpop.f32.mrf.mxu0
    %v1902 = vadd.f32 0.0, %v1901
    %1903 = vdwg.mxu0
    %v1904 = vadd.f32 %v1760, %v1899
    %v1905 = vadd.f32 %v1761, %v1902
    %v1906 = vperm.slane %v1102, 5
    %v1907 = vadd.f32 %v1904, %v1906
    %v1908 = vadd.f32 %v1905, %v1906
    %v1909 = vld [vmem:[%s3 + $0x3] sm:$0x1]
    %v1910 = vld [vmem:[%s3 + $0x4] sm:$0x1]
    %v1911 = vsel %vm224, %v1907, 0.0
    %1912 = vadd.xlane.f32.xlu0 %v1911
    %v1913 = vpop.xlane.xlu0 %1912
    %v1914 = vsel %vm228, %v1908, 0.0
    %1915 = vadd.xlane.f32.xlu0 %v1914
    %v1916 = vpop.xlane.xlu0 %1915
    %v1917 = vmul.f32 %v1913, %v238
    %v1918 = vmul.f32 %v1916, %v238
    %v1919 = vsub.f32 %v1907, %v1917
    %v1920 = vsub.f32 %v1908, %v1918
    %v1921 = vmul.f32 %v1919, %v1919
    %v1922 = vmul.f32 %v1920, %v1920
    %v1923 = vsel %vm224, %v1921, 0.0
    %1924 = vadd.xlane.f32.xlu0 %v1923
    %v1925 = vpop.xlane.xlu0 %1924
    %v1926 = vsel %vm228, %v1922, 0.0
    %1927 = vadd.xlane.f32.xlu0 %v1926
    %v1928 = vpop.xlane.xlu0 %1927
    %v1929 = vmul.f32 %v1925, %v238
    %v1930 = vmul.f32 %v1928, %v238
    %v1931 = vadd.f32 %v1929, 1e-05
    %v1932 = vadd.f32 %v1930, 1e-05
    %v1933 = vrsqrt.pop %v1931
    %v1934 = vmul.f32 %v1933, %v1931
    %v1935 = vmul.f32 %v1934, %v1933
    %v1936 = vmul.f32 0.5, %v1935
    %v1937 = vsub.f32 1.5, %v1936
    %v1938 = vmul.f32 %v1933, %v1937
    %vm1939 = vweird.f32 %v1931
    %vm1940 = vweird.f32 %v1933
    %vm1941 = vmor %vm1939, %vm1940
    %v1942 = vsel %vm1941, %v1933, %v1938
    %v1943 = vrsqrt.pop %v1932
    %v1944 = vmul.f32 %v1943, %v1932
    %v1945 = vmul.f32 %v1944, %v1943
    %v1946 = vmul.f32 0.5, %v1945
    %v1947 = vsub.f32 1.5, %v1946
    %v1948 = vmul.f32 %v1943, %v1947
    %vm1949 = vweird.f32 %v1932
    %vm1950 = vweird.f32 %v1943
    %vm1951 = vmor %vm1949, %vm1950
    %v1952 = vsel %vm1951, %v1943, %v1948
    %v1953 = vmul.f32 %v1919, %v1942
    %v1954 = vmul.f32 %v1920, %v1952
    %v1955 = vperm.slane %v1909, 0
    %v1956 = vmul.f32 %v1953, %v1955
    %v1957 = vmul.f32 %v1954, %v1955
    %v1958 = vperm.slane %v1910, 0
    %v1959 = vadd.f32 %v1956, %v1958
    %v1960 = vadd.f32 %v1957, %v1958
    %1961 = vst.msk [vmem:[%s15] sm:$0xff] %vm224, %v1959
    %1962 = vst.msk [vmem:[%s15 + $0x8] sm:$0x3] %vm228, %v1960
    %v1963 = vld [vmem:[%s7] sm:$0x3]
    %v1965 = vsel %vm419, %v1963, 0
    %v1968 = vsel %vm65, %v1960, 0
    %1970 = vmatpush.msra.mxu0 0.0
    %1971 = vmatpush.msra.mxu0 0.0
    %1972 = vmatpush.msra.mxu0 0.0
    %1973 = vmatpush.msra.mxu0 0.0
    %1974 = vmatpush.msra.mxu0 0.0
    %1975 = vmatpush.msra.mxu0 0.0
    %1976 = vmatpush.msra.mxu0 0.0
    %1977 = vmatpush.msra.mxu0 0.0
    %1978 = vmatpush.msra.mxu0 0.0
    %1979 = vmatpush.msra.mxu0 0.0
    %1980 = vmatpush.msra.mxu0 0.0
    %1981 = vmatpush.msra.mxu0 0.0
    %1982 = vmatpush.msra.mxu0 0.0
    %1983 = vmatpush.msra.mxu0 0.0
    %1984 = vmatpush.msra.mxu0 %v1968
    %1985 = vmatpush.msra.mxu0 %v1959
    %1986 = vmatmul.f32.gmra.mxu0 %v1965
    %v1987 = vpop.f32.mrf.mxu0
    %v1988 = vadd.f32 0.0, %v1987
    %1989 = vdwg.mxu0
    %v1990 = vld [vmem:[%s14] sm:$0xff]
    %v1991 = vld [vmem:[%s14 + $0x8] sm:$0xff]
    %v1992 = vld [vmem:[%s14 + $0x10] sm:$0xff]
    %v1993 = vld [vmem:[%s14 + $0x18] sm:$0xff]
    %v1994 = vld [vmem:[%s14 + $0x20] sm:$0x1]
    %v1995 = vperm.slane %v1994, 0
    %v1997 = vsel %vm224, %v1988, 0
    %1999 = vmatpush.msra.mxu0 0.0
    %2000 = vmatpush.msra.mxu0 0.0
    %2001 = vmatpush.msra.mxu0 0.0
    %2002 = vmatpush.msra.mxu0 0.0
    %2003 = vmatpush.msra.mxu0 0.0
    %2004 = vmatpush.msra.mxu0 0.0
    %2005 = vmatpush.msra.mxu0 0.0
    %2006 = vmatpush.msra.mxu0 0.0
    %2007 = vmatpush.msra.mxu0 0.0
    %2008 = vmatpush.msra.mxu0 0.0
    %2009 = vmatpush.msra.mxu0 0.0
    %2010 = vmatpush.msra.mxu0 0.0
    %2011 = vmatpush.msra.mxu0 %v1993
    %2012 = vmatpush.msra.mxu0 %v1992
    %2013 = vmatpush.msra.mxu0 %v1991
    %2014 = vmatpush.msra.mxu0 %v1990
    %2015 = vmatmul.f32.gmra.mxu0 %v1997
    %v2016 = vpop.f32.mrf.mxu0
    %v2017 = vadd.f32 %v1995, %v2016
    %2018 = vdwg.mxu0
    %2019 = vst [vmem:[#allocation2] sm:$0x3] %v2017
    // Predicated region
    $region62: #{vit_forward.1} parent=1 // pred_check
      _
    $region63: #{vit_forward.1} parent=1 // pred_check_branch
      %2021 = sbr.rel (0) target = $region65
    $region64: #{vit_forward.1} parent=1 // pred_region
      _
    $region65: #{vit_forward.1} parent=1 // pred_fallthru
      _
    // Predicated region
    $region66: #{vit_forward.1} parent=1 // pred_check
      _
    $region67: #{vit_forward.1} parent=1 // pred_check_branch
      %2023 = sbr.rel (0) target = $region69
    $region68: #{vit_forward.1} parent=1 // pred_region
      %2025 = vsyncadd [#allocation3], 0
      %s2027 = sshll.u32 [#allocation2], 4
      %s2028 = int_to_ptr.vmem [resolvable:$true] %s2027
      %s2029 = sshll.u32 %s16, 4
      %s2030 = int_to_ptr.hbm [resolvable:$true] %s2029
      %2032 = dma.vmem_to_hbm [thread:$0]  %s2028, 32, %s2030, [#allocation3]
    $region69: #{vit_forward.1} parent=1 // pred_fallthru
      _
    // Predicated region
    $region70: #{vit_forward.1} parent=1 // pred_check
      _
    $region71: #{vit_forward.1} parent=1 // pred_check_branch
      %2034 = sbr.rel (0) target = $region73
    $region72: #{vit_forward.1} parent=1 // pred_region
      _
    $region73: #{vit_forward.1} parent=1 // pred_fallthru
      _
    // Predicated region
    $region74: #{vit_forward.1} parent=1 // pred_check
      _
    $region75: #{vit_forward.1} parent=1 // pred_check_branch
      %2036 = sbr.rel (0) target = $region77
    $region76: #{vit_forward.1} parent=1 // pred_region
      %2038 = dma.done [#allocation3], 32
    $region77: #{vit_forward.1} parent=1 // pred_fallthru
      _
    %2039 = vsyncpa [#allocation3], 1

</llo_original>
